<compile_context>
chip_gen: v6e
topology: v6e:2x2x1
jax: 0.10.0
libtpu: 0.0.40
codegen_flags: <defaults>
</compile_context>

<pallas_src>
import math
import functools

import jax
import jax.numpy as jnp
from jax.experimental import pallas as pl
from jax.experimental.pallas import tpu as pltpu


# ----------------------------------------------------------------------------
# Helpers
# ----------------------------------------------------------------------------
def _full_spec(shape):
    nd = len(shape)
    return pl.BlockSpec(shape, lambda i, _nd=nd: (0,) * _nd)


# ----------------------------------------------------------------------------
# ConvGate kernel: Conv1d(k=3, s=2) -> BN(eval) -> ReLU -> AvgPool1d -> mean
#                  -> Linear(C,1) -> sigmoid    (prob only; mask in wrapper)
# ----------------------------------------------------------------------------
def gate_kernel(x_ref, wconv_ref, scale_ref, shift_ref, wlin_ref, blin_ref,
                prob_ref, *, conv_len, pool_rows):
    C = x_ref.shape[1]

    # Conv1d (kernel=3, stride=2): y[t] = sum_k x[2t+k] @ W_k   (bf16 MXU)
    # NOTE: strided sublane ref reads kept (vs an in-kernel reshape trick) for
    # robust Mosaic lowering; data volume here is tiny.
    def tap(k):
        return x_ref[pl.ds(k, conv_len, stride=2), :].astype(jnp.bfloat16)

    y = jnp.dot(tap(0), wconv_ref[0], preferred_element_type=jnp.float32)
    for k in (1, 2):
        y = y + jnp.dot(tap(k), wconv_ref[k],
                        preferred_element_type=jnp.float32)

    # Conv bias + eval-mode BatchNorm folded into one affine, then ReLU.
    y = jnp.maximum(y * scale_ref[...] + shift_ref[...], 0.0)

    # AvgPool1d(pool_k, stride=pool_k) followed by mean over pooled positions
    # == mean over the first num_pool*pool_k conv rows (equal-size windows);
    # one fused sublane reduction, one scalar multiply.
    feat = jnp.sum(y[:pool_rows, :], axis=0, keepdims=True) * (1.0 / pool_rows)

    # Linear(C -> 1) as a VPU lane reduction (avoids a lane-width-1 MXU pass),
    # then sigmoid.
    z = jnp.sum(feat * wlin_ref[...], axis=1, keepdims=True) + blin_ref[...]
    prob_ref[...] = jax.nn.sigmoid(z)


def conv_gate(x2d, p):
    S, C = x2d.shape
    conv_len = (S - 3) // 2 + 1
    pool_k = math.floor(p["pool_size"] / 2 + 0.5)      # matches the PyTorch code
    num_pool = (conv_len - pool_k) // pool_k + 1       # AvgPool1d, ceil_mode=False
    assert num_pool >= 1, "AvgPool1d output length must be >= 1"

    kern = functools.partial(gate_kernel, conv_len=conv_len,
                             pool_rows=num_pool * pool_k)
    prob = pl.pallas_call(
        kern,
        grid=(1,),
        in_specs=[
            _full_spec((S, C)),
            _full_spec((3, C, C)),
            _full_spec((1, C)),
            _full_spec((1, C)),
            _full_spec((1, C)),
            _full_spec((1, 1)),
        ],
        out_specs=_full_spec((1, 1)),
        out_shape=jax.ShapeDtypeStruct((1, 1), jnp.float32),
        compiler_params=pltpu.CompilerParams(
            dimension_semantics=("arbitrary",)),
    )(x2d, p["conv_w_t"], p["gate_scale"], p["gate_shift"],
      p["lin_w"], p["lin_b"])
    return prob


# ----------------------------------------------------------------------------
# TransformerEncoderLayer kernel (post-norm, ReLU, batch_first, eval/no-dropout)
# ----------------------------------------------------------------------------
def encoder_kernel(x_ref, wqkv_ref, bqkv_ref, wo_ref, bo_ref,
                   ln1w_ref, ln1b_ref, w1_ref, b1_ref, w2_ref, b2_ref,
                   ln2w_ref, ln2b_ref, out_ref, *, num_heads):
    x = x_ref[...]                                   # (S, E) f32
    S, E = x.shape
    H = num_heads
    Dh = E // H
    scale = 1.0 / math.sqrt(Dh)
    x_bf = x.astype(jnp.bfloat16)

    # Multi-head attention with per-head weight slabs:
    #   wqkv_ref : (3, H, E, Dh) bf16   q/k/v projections (lane-dense slabs)
    #   wo_ref   : (H, Dh, E)    bf16   output projection split by head
    # concat(head_0..head_{H-1}) @ Wo^T == sum_h head_h @ Wo^T[h*Dh:(h+1)*Dh, :]
    # so no lane slicing, transposes or concatenation of activations is needed.
    attn = jnp.zeros((S, E), jnp.float32)
    for h in range(H):
        qh = (jnp.dot(x_bf, wqkv_ref[0, h], preferred_element_type=jnp.float32)
              + bqkv_ref[0, h])
        kh = (jnp.dot(x_bf, wqkv_ref[1, h], preferred_element_type=jnp.float32)
              + bqkv_ref[1, h])
        vh = (jnp.dot(x_bf, wqkv_ref[2, h], preferred_element_type=jnp.float32)
              + bqkv_ref[2, h])
        # q @ k^T via trailing-dim contraction (no materialized transpose).
        s = jax.lax.dot_general(
            qh.astype(jnp.bfloat16), kh.astype(jnp.bfloat16),
            dimension_numbers=(((1,), (1,)), ((), ())),
            preferred_element_type=jnp.float32) * scale
        s = s - jnp.max(s, axis=-1, keepdims=True)
        pr = jnp.exp(s)
        pr = pr * pl.reciprocal(jnp.sum(pr, axis=-1, keepdims=True), approx=True)
        head = jnp.dot(pr.astype(jnp.bfloat16), vh.astype(jnp.bfloat16),
                       preferred_element_type=jnp.float32)            # (S, Dh)
        attn = attn + jnp.dot(head.astype(jnp.bfloat16), wo_ref[h],
                              preferred_element_type=jnp.float32)     # (S, E)
    attn = attn + bo_ref[...]

    # Residual + LayerNorm1 (f32).
    x1 = x + attn
    mu1 = jnp.mean(x1, axis=-1, keepdims=True)
    var1 = jnp.mean((x1 - mu1) ** 2, axis=-1, keepdims=True)
    x1n = (x1 - mu1) * jax.lax.rsqrt(var1 + 1e-5) * ln1w_ref[...] + ln1b_ref[...]

    # Feed-forward: Linear -> ReLU -> Linear (bf16 MXU, f32 accumulation).
    h1 = jnp.dot(x1n.astype(jnp.bfloat16), w1_ref[...],
                 preferred_element_type=jnp.float32) + b1_ref[...]
    h1 = jnp.maximum(h1, 0.0)
    ff = jnp.dot(h1.astype(jnp.bfloat16), w2_ref[...],
                 preferred_element_type=jnp.float32) + b2_ref[...]

    # Residual + LayerNorm2 (f32).
    x2 = x1n + ff
    mu2 = jnp.mean(x2, axis=-1, keepdims=True)
    var2 = jnp.mean((x2 - mu2) ** 2, axis=-1, keepdims=True)
    out_ref[...] = ((x2 - mu2) * jax.lax.rsqrt(var2 + 1e-5)
                    * ln2w_ref[...] + ln2b_ref[...])


def encoder_layer(x2d, p):
    S, E = x2d.shape
    H = p["num_heads"]
    Dh = E // H
    F = p["lin1_w_t"].shape[1]
    kern = functools.partial(encoder_kernel, num_heads=H)
    # NOTE: shapes here are tiny (everything fits VMEM many times over); for
    # larger E/F/S this should be re-tiled over S (parallel) / F / KV with an
    # explicit pltpu.CompilerParams(vmem_limit_bytes=...) budget.
    out = pl.pallas_call(
        kern,
        grid=(1,),
        in_specs=[
            _full_spec((S, E)),
            _full_spec((3, H, E, Dh)), _full_spec((3, H, 1, Dh)),
            _full_spec((H, Dh, E)), _full_spec((1, E)),
            _full_spec((1, E)), _full_spec((1, E)),
            _full_spec((E, F)), _full_spec((1, F)),
            _full_spec((F, E)), _full_spec((1, E)),
            _full_spec((1, E)), _full_spec((1, E)),
        ],
        out_specs=_full_spec((S, E)),
        out_shape=jax.ShapeDtypeStruct((S, E), jnp.float32),
        compiler_params=pltpu.CompilerParams(
            dimension_semantics=("arbitrary",)),
    )(x2d, p["wqkv_h"], p["bqkv_h"], p["wo_h"], p["out_proj_b"],
      p["ln1_w"], p["ln1_b"], p["lin1_w_t"], p["lin1_b"],
      p["lin2_w_t"], p["lin2_b"], p["ln2_w"], p["ln2_b"])
    return out


# ----------------------------------------------------------------------------
# GatedTransformerEncoderLayer forward (batch size must be 1)
# ----------------------------------------------------------------------------
def gated_transformer_encoder_layer(x, params):
    assert x.shape[0] == 1, "Batch size must be 1 when the model is not under training."
    x2d = x[0]                                           # (S, E)
    prob = conv_gate(x2d, params)                        # (1, 1)
    mask = (prob > 0.5).astype(jnp.float32)              # straight-through fwd value
    # Matches PyTorch: only run the encoder when the gate fires -> the entire
    # encoder pass (kernel launch + HBM traffic) is skipped when mask == 0.
    out2d = jax.lax.cond(prob[0, 0] > 0.5,
                         lambda: encoder_layer(x2d, params),
                         lambda: x2d)
    return out2d[None, :, :], mask, prob


# ----------------------------------------------------------------------------
# Deterministic parameter construction (PyTorch-style weights -> kernel layout)
# ----------------------------------------------------------------------------
def init_params(key, embed_dim, num_heads, fc_dim, pool_size):
    ks = jax.random.split(key, 12)
    E, F, C, H = embed_dim, fc_dim, embed_dim, num_heads
    Dh = E // H

    def nrm(k, shape, s=0.1):
        return jax.random.normal(k, shape, jnp.float32) * s

    # ---- ConvGate ----------------------------------------------------------
    conv_w = nrm(ks[0], (C, C, 3))                 # Conv1d weight (C_out, C_in, K)
    conv_b = nrm(ks[1], (C,))
    gamma = jnp.ones((C,), jnp.float32)            # fresh BatchNorm1d (eval stats)
    beta = jnp.zeros((C,), jnp.float32)
    rmean = jnp.zeros((C,), jnp.float32)
    rvar = jnp.ones((C,), jnp.float32)
    lin_w = nrm(ks[2], (1, C))
    lin_b = nrm(ks[3], (1,))
    # Fold conv bias + eval-mode BN into one affine: y*scale + shift.
    bn_scale = gamma * jax.lax.rsqrt(rvar + 1e-5)
    bn_shift = (conv_b - rmean) * bn_scale + beta

    # ---- TransformerEncoderLayer -------------------------------------------
    in_proj_w = nrm(ks[4], (3 * E, E))             # rows: [Wq; Wk; Wv]
    in_proj_b = nrm(ks[5], (3 * E,))
    out_proj_w = nrm(ks[6], (E, E))
    out_proj_b = nrm(ks[7], (E,))
    lin1_w = nrm(ks[8], (F, E))
    lin1_b = nrm(ks[9], (F,))
    lin2_w = nrm(ks[10], (E, F))
    lin2_b = nrm(ks[11], (E,))

    # Per-head projection slabs: wqkv_h[j, h] = W_j^T[:, h*Dh:(h+1)*Dh]  (E, Dh)
    wqkv_h = (in_proj_w.reshape(3, E, E)           # (3, E_out, E_in)
              .transpose(0, 2, 1)                  # (3, E_in, E_out) = W^T
              .reshape(3, E, H, Dh)
              .transpose(0, 2, 1, 3))              # (3, H, E_in, Dh)
    bqkv_h = in_proj_b.reshape(3, H, 1, Dh)
    # Output projection split by head: wo_h[h] = Wo^T[h*Dh:(h+1)*Dh, :]  (Dh, E)
    wo_h = out_proj_w.T.reshape(H, Dh, E)

    return {
        "num_heads": H,
        "pool_size": pool_size,
        # ConvGate (conv taps pre-transposed to (K, C_in, C_out); bf16 for MXU)
        "conv_w_t": jnp.transpose(conv_w, (2, 1, 0)).astype(jnp.bfloat16),
        "gate_scale": bn_scale.reshape(1, C),
        "gate_shift": bn_shift.reshape(1, C),
        "lin_w": lin_w.reshape(1, C),
        "lin_b": lin_b.reshape(1, 1),
        # Encoder (bf16 matmul weights, f32 biases / norm params)
        "wqkv_h": wqkv_h.astype(jnp.bfloat16),
        "bqkv_h": bqkv_h,
        "wo_h": wo_h.astype(jnp.bfloat16),
        "out_proj_b": out_proj_b.reshape(1, E),
        "ln1_w": jnp.ones((1, E), jnp.float32),
        "ln1_b": jnp.zeros((1, E), jnp.float32),
        "lin1_w_t": lin1_w.T.astype(jnp.bfloat16),     # (E, F)
        "lin1_b": lin1_b.reshape(1, F),
        "lin2_w_t": lin2_w.T.astype(jnp.bfloat16),     # (F, E)
        "lin2_b": lin2_b.reshape(1, E),
        "ln2_w": jnp.ones((1, E), jnp.float32),
        "ln2_b": jnp.zeros((1, E), jnp.float32),
    }


if __name__ == "__main__":
    embed_dim, num_heads, fc_dim, pool_size = 32, 4, 64, 8
    batch, seq_len = 1, 16

    key = jax.random.PRNGKey(0)
    kx, kp = jax.random.split(key)
    x = jax.random.normal(kx, (batch, seq_len, embed_dim), jnp.float32)
    params = init_params(kp, embed_dim, num_heads, fc_dim, pool_size)

    fwd = jax.jit(lambda xx: gated_transformer_encoder_layer(xx, params))
    out, mask, prob = fwd(x)
    jax.block_until_ready((out, mask, prob))

    assert out.shape == (batch, seq_len, embed_dim)
    assert mask.shape == (1, 1) and prob.shape == (1, 1)
    print("KERNEL_OK")
</pallas_src>

<mosaic_0001>
module attributes {stable_mosaic.version = 11 : i64} {
  func.func @gate_kernel(%arg0: i32, %arg1: memref<16x32xf32, #tpu.memory_space<vmem>>, %arg2: memref<3x32x32xbf16, #tpu.memory_space<vmem>>, %arg3: memref<1x32xf32, #tpu.memory_space<vmem>>, %arg4: memref<1x32xf32, #tpu.memory_space<vmem>>, %arg5: memref<1x32xf32, #tpu.memory_space<vmem>>, %arg6: memref<1x1xf32, #tpu.memory_space<vmem>>, %arg7: memref<1x1xf32, #tpu.memory_space<vmem>>) attributes {dimension_semantics = [#tpu.dimension_semantics<arbitrary>], iteration_bounds = array<i64: 1>, scalar_prefetch = 0 : i64, scratch_operands = 0 : i64, tpu.core_type = #tpu.core_type<tc>, window_params = [{pipeline_mode = #tpu.pipeline_mode<synchronous>, transform_indices = @transform_0, window_bounds = array<i64: 16, 32>}, {pipeline_mode = #tpu.pipeline_mode<synchronous>, transform_indices = @transform_1, window_bounds = array<i64: 3, 32, 32>}, {pipeline_mode = #tpu.pipeline_mode<synchronous>, transform_indices = @transform_2, window_bounds = array<i64: 1, 32>}, {pipeline_mode = #tpu.pipeline_mode<synchronous>, transform_indices = @transform_3, window_bounds = array<i64: 1, 32>}, {pipeline_mode = #tpu.pipeline_mode<synchronous>, transform_indices = @transform_4, window_bounds = array<i64: 1, 32>}, {pipeline_mode = #tpu.pipeline_mode<synchronous>, transform_indices = @transform_5, window_bounds = array<i64: 1, 1>}, {pipeline_mode = #tpu.pipeline_mode<synchronous>, transform_indices = @transform_6, window_bounds = array<i64: 1, 1>}]} {
    %c0 = arith.constant 0 : index
    %c0_0 = arith.constant 0 : index
    %0 = tpu.strided_load %arg1[%c0, %c0_0] {strides = array<i32: 2, 1>} : memref<16x32xf32, #tpu.memory_space<vmem>>, vector<7x32xf32>
    %1 = arith.truncf %0 : vector<7x32xf32> to vector<7x32xbf16>
    %c0_1 = arith.constant 0 : index
    %c0_2 = arith.constant 0 : index
    %c0_3 = arith.constant 0 : index
    %2 = vector.load %arg2[%c0_1, %c0_2, %c0_3] : memref<3x32x32xbf16, #tpu.memory_space<vmem>>, vector<1x32x32xbf16>
    %3 = vector.shape_cast %2 : vector<1x32x32xbf16> to vector<32x32xbf16>
    %cst = arith.constant dense<0.000000e+00> : vector<7x32xf32>
    %4 = tpu.matmul %1, %3, %cst {dimension_numbers = #tpu.dot_dimension_numbers<[1], [0], [0], [1], [0, 0, 1, 1], [], []>} : vector<7x32xbf16>, vector<32x32xbf16>, vector<7x32xf32> -> vector<7x32xf32>
    %c1 = arith.constant 1 : index
    %c0_4 = arith.constant 0 : index
    %5 = tpu.strided_load %arg1[%c1, %c0_4] {strides = array<i32: 2, 1>} : memref<16x32xf32, #tpu.memory_space<vmem>>, vector<7x32xf32>
    %6 = arith.truncf %5 : vector<7x32xf32> to vector<7x32xbf16>
    %c1_5 = arith.constant 1 : index
    %c0_6 = arith.constant 0 : index
    %c0_7 = arith.constant 0 : index
    %7 = vector.load %arg2[%c1_5, %c0_6, %c0_7] : memref<3x32x32xbf16, #tpu.memory_space<vmem>>, vector<1x32x32xbf16>
    %8 = vector.shape_cast %7 : vector<1x32x32xbf16> to vector<32x32xbf16>
    %cst_8 = arith.constant dense<0.000000e+00> : vector<7x32xf32>
    %9 = tpu.matmul %6, %8, %cst_8 {dimension_numbers = #tpu.dot_dimension_numbers<[1], [0], [0], [1], [0, 0, 1, 1], [], []>} : vector<7x32xbf16>, vector<32x32xbf16>, vector<7x32xf32> -> vector<7x32xf32>
    %10 = arith.addf %4, %9 : vector<7x32xf32>
    %c2 = arith.constant 2 : index
    %c0_9 = arith.constant 0 : index
    %11 = tpu.strided_load %arg1[%c2, %c0_9] {strides = array<i32: 2, 1>} : memref<16x32xf32, #tpu.memory_space<vmem>>, vector<7x32xf32>
    %12 = arith.truncf %11 : vector<7x32xf32> to vector<7x32xbf16>
    %c2_10 = arith.constant 2 : index
    %c0_11 = arith.constant 0 : index
    %c0_12 = arith.constant 0 : index
    %13 = vector.load %arg2[%c2_10, %c0_11, %c0_12] : memref<3x32x32xbf16, #tpu.memory_space<vmem>>, vector<1x32x32xbf16>
    %14 = vector.shape_cast %13 : vector<1x32x32xbf16> to vector<32x32xbf16>
    %cst_13 = arith.constant dense<0.000000e+00> : vector<7x32xf32>
    %15 = tpu.matmul %12, %14, %cst_13 {dimension_numbers = #tpu.dot_dimension_numbers<[1], [0], [0], [1], [0, 0, 1, 1], [], []>} : vector<7x32xbf16>, vector<32x32xbf16>, vector<7x32xf32> -> vector<7x32xf32>
    %16 = arith.addf %10, %15 : vector<7x32xf32>
    %c0_14 = arith.constant 0 : index
    %c0_15 = arith.constant 0 : index
    %17 = vector.load %arg3[%c0_14, %c0_15] : memref<1x32xf32, #tpu.memory_space<vmem>>, vector<1x32xf32>
    %18 = vector.broadcast %17 : vector<1x32xf32> to vector<7x32xf32>
    %19 = arith.mulf %16, %18 : vector<7x32xf32>
    %c0_16 = arith.constant 0 : index
    %c0_17 = arith.constant 0 : index
    %20 = vector.load %arg4[%c0_16, %c0_17] : memref<1x32xf32, #tpu.memory_space<vmem>>, vector<1x32xf32>
    %21 = vector.broadcast %20 : vector<1x32xf32> to vector<7x32xf32>
    %22 = arith.addf %19, %21 : vector<7x32xf32>
    %cst_18 = arith.constant 0.000000e+00 : f32
    %23 = vector.broadcast %cst_18 : f32 to vector<7x32xf32>
    %24 = arith.maximumf %22, %23 : vector<7x32xf32>
    %25 = vector.extract_strided_slice %24 {offsets = [0, 0], sizes = [4, 32], strides = [1, 1]} : vector<7x32xf32> to vector<4x32xf32>
    %cst_19 = arith.constant dense<0.000000e+00> : vector<32xf32>
    %26 = vector.multi_reduction <add>, %25, %cst_19 [0] : vector<4x32xf32> to vector<32xf32>
    %27 = vector.shape_cast %26 : vector<32xf32> to vector<1x32xf32>
    %cst_20 = arith.constant 2.500000e-01 : f32
    %28 = vector.broadcast %cst_20 : f32 to vector<1x32xf32>
    %29 = arith.mulf %27, %28 : vector<1x32xf32>
    %c0_21 = arith.constant 0 : index
    %c0_22 = arith.constant 0 : index
    %30 = vector.load %arg5[%c0_21, %c0_22] : memref<1x32xf32, #tpu.memory_space<vmem>>, vector<1x32xf32>
    %31 = arith.mulf %29, %30 : vector<1x32xf32>
    %cst_23 = arith.constant dense<0.000000e+00> : vector<1xf32>
    %32 = vector.multi_reduction <add>, %31, %cst_23 [1] : vector<1x32xf32> to vector<1xf32>
    %33 = vector.shape_cast %32 : vector<1xf32> to vector<1x1xf32>
    %c0_24 = arith.constant 0 : index
    %c0_25 = arith.constant 0 : index
    %34 = vector.load %arg6[%c0_24, %c0_25] : memref<1x1xf32, #tpu.memory_space<vmem>>, vector<1x1xf32>
    %35 = arith.addf %33, %34 : vector<1x1xf32>
    %36 = arith.negf %35 : vector<1x1xf32>
    %37 = math.exp %36 : vector<1x1xf32>
    %cst_26 = arith.constant 1.000000e+00 : f32
    %38 = vector.broadcast %cst_26 : f32 to vector<1x1xf32>
    %39 = arith.addf %38, %37 : vector<1x1xf32>
    %40 = arith.divf %38, %39 : vector<1x1xf32>
    %c0_27 = arith.constant 0 : index
    %c0_28 = arith.constant 0 : index
    %41 = vector.load %arg7[%c0_27, %c0_28] : memref<1x1xf32, #tpu.memory_space<vmem>>, vector<1x1xf32>
    tpu.vector_store %arg7[%c0_27, %c0_28], %40 {strides = array<i32>} : memref<1x1xf32, #tpu.memory_space<vmem>>, vector<1x1xf32>,
    return
  }
  func.func @transform_0(%arg0: i32) -> (i32, i32) {
    %c0_i32 = arith.constant 0 : i32
    %c0_i32_0 = arith.constant 0 : i32
    %c0_i32_1 = arith.constant 0 : i32
    return %c0_i32, %c0_i32_0 : i32, i32
  }
  func.func @transform_1(%arg0: i32) -> (i32, i32, i32) {
    %c0_i32 = arith.constant 0 : i32
    %c0_i32_0 = arith.constant 0 : i32
    %c0_i32_1 = arith.constant 0 : i32
    %c0_i32_2 = arith.constant 0 : i32
    return %c0_i32, %c0_i32_0, %c0_i32_1 : i32, i32, i32
  }
  func.func @transform_2(%arg0: i32) -> (i32, i32) {
    %c0_i32 = arith.constant 0 : i32
    %c0_i32_0 = arith.constant 0 : i32
    %c0_i32_1 = arith.constant 0 : i32
    return %c0_i32, %c0_i32_0 : i32, i32
  }
  func.func @transform_3(%arg0: i32) -> (i32, i32) {
    %c0_i32 = arith.constant 0 : i32
    %c0_i32_0 = arith.constant 0 : i32
    %c0_i32_1 = arith.constant 0 : i32
    return %c0_i32, %c0_i32_0 : i32, i32
  }
  func.func @transform_4(%arg0: i32) -> (i32, i32) {
    %c0_i32 = arith.constant 0 : i32
    %c0_i32_0 = arith.constant 0 : i32
    %c0_i32_1 = arith.constant 0 : i32
    return %c0_i32, %c0_i32_0 : i32, i32
  }
  func.func @transform_5(%arg0: i32) -> (i32, i32) {
    %c0_i32 = arith.constant 0 : i32
    %c0_i32_0 = arith.constant 0 : i32
    %c0_i32_1 = arith.constant 0 : i32
    return %c0_i32, %c0_i32_0 : i32, i32
  }
  func.func @transform_6(%arg0: i32) -> (i32, i32) {
    %c0_i32 = arith.constant 0 : i32
    %c0_i32_0 = arith.constant 0 : i32
    %c0_i32_1 = arith.constant 0 : i32
    return %c0_i32, %c0_i32_0 : i32, i32
  }
}

module attributes {stable_mosaic.version = 11 : i64} {
  func.func @encoder_kernel(%arg0: i32, %arg1: memref<16x32xf32, #tpu.memory_space<vmem>>, %arg2: memref<3x4x32x8xbf16, #tpu.memory_space<vmem>>, %arg3: memref<3x4x1x8xf32, #tpu.memory_space<vmem>>, %arg4: memref<4x8x32xbf16, #tpu.memory_space<vmem>>, %arg5: memref<1x32xf32, #tpu.memory_space<vmem>>, %arg6: memref<1x32xf32, #tpu.memory_space<vmem>>, %arg7: memref<1x32xf32, #tpu.memory_space<vmem>>, %arg8: memref<32x64xbf16, #tpu.memory_space<vmem>>, %arg9: memref<1x64xf32, #tpu.memory_space<vmem>>, %arg10: memref<64x32xbf16, #tpu.memory_space<vmem>>, %arg11: memref<1x32xf32, #tpu.memory_space<vmem>>, %arg12: memref<1x32xf32, #tpu.memory_space<vmem>>, %arg13: memref<1x32xf32, #tpu.memory_space<vmem>>, %arg14: memref<16x32xf32, #tpu.memory_space<vmem>>) attributes {dimension_semantics = [#tpu.dimension_semantics<arbitrary>], iteration_bounds = array<i64: 1>, scalar_prefetch = 0 : i64, scratch_operands = 0 : i64, tpu.core_type = #tpu.core_type<tc>, window_params = [{pipeline_mode = #tpu.pipeline_mode<synchronous>, transform_indices = @transform_0, window_bounds = array<i64: 16, 32>}, {pipeline_mode = #tpu.pipeline_mode<synchronous>, transform_indices = @transform_1, window_bounds = array<i64: 3, 4, 32, 8>}, {pipeline_mode = #tpu.pipeline_mode<synchronous>, transform_indices = @transform_2, window_bounds = array<i64: 3, 4, 1, 8>}, {pipeline_mode = #tpu.pipeline_mode<synchronous>, transform_indices = @transform_3, window_bounds = array<i64: 4, 8, 32>}, {pipeline_mode = #tpu.pipeline_mode<synchronous>, transform_indices = @transform_4, window_bounds = array<i64: 1, 32>}, {pipeline_mode = #tpu.pipeline_mode<synchronous>, transform_indices = @transform_5, window_bounds = array<i64: 1, 32>}, {pipeline_mode = #tpu.pipeline_mode<synchronous>, transform_indices = @transform_6, window_bounds = array<i64: 1, 32>}, {pipeline_mode = #tpu.pipeline_mode<synchronous>, transform_indices = @transform_7, window_bounds = array<i64: 32, 64>}, {pipeline_mode = #tpu.pipeline_mode<synchronous>, transform_indices = @transform_8, window_bounds = array<i64: 1, 64>}, {pipeline_mode = #tpu.pipeline_mode<synchronous>, transform_indices = @transform_9, window_bounds = array<i64: 64, 32>}, {pipeline_mode = #tpu.pipeline_mode<synchronous>, transform_indices = @transform_10, window_bounds = array<i64: 1, 32>}, {pipeline_mode = #tpu.pipeline_mode<synchronous>, transform_indices = @transform_11, window_bounds = array<i64: 1, 32>}, {pipeline_mode = #tpu.pipeline_mode<synchronous>, transform_indices = @transform_12, window_bounds = array<i64: 1, 32>}, {pipeline_mode = #tpu.pipeline_mode<synchronous>, transform_indices = @transform_13, window_bounds = array<i64: 16, 32>}]} {
    %c0 = arith.constant 0 : index
    %c0_0 = arith.constant 0 : index
    %0 = vector.load %arg1[%c0, %c0_0] : memref<16x32xf32, #tpu.memory_space<vmem>>, vector<16x32xf32>
    %1 = arith.truncf %0 : vector<16x32xf32> to vector<16x32xbf16>
    %cst = arith.constant 0.000000e+00 : f32
    %2 = vector.broadcast %cst : f32 to vector<16x32xf32>
    %c0_1 = arith.constant 0 : index
    %c0_2 = arith.constant 0 : index
    %c0_3 = arith.constant 0 : index
    %c0_4 = arith.constant 0 : index
    %3 = vector.load %arg2[%c0_1, %c0_2, %c0_3, %c0_4] : memref<3x4x32x8xbf16, #tpu.memory_space<vmem>>, vector<1x1x32x8xbf16>
    %4 = vector.shape_cast %3 : vector<1x1x32x8xbf16> to vector<32x8xbf16>
    %cst_5 = arith.constant dense<0.000000e+00> : vector<16x8xf32>
    %5 = tpu.matmul %1, %4, %cst_5 {dimension_numbers = #tpu.dot_dimension_numbers<[1], [0], [0], [1], [0, 0, 1, 1], [], []>} : vector<16x32xbf16>, vector<32x8xbf16>, vector<16x8xf32> -> vector<16x8xf32>
    %c0_6 = arith.constant 0 : index
    %c0_7 = arith.constant 0 : index
    %c0_8 = arith.constant 0 : index
    %c0_9 = arith.constant 0 : index
    %6 = vector.load %arg3[%c0_6, %c0_7, %c0_8, %c0_9] : memref<3x4x1x8xf32, #tpu.memory_space<vmem>>, vector<1x1x1x8xf32>
    %7 = vector.shape_cast %6 : vector<1x1x1x8xf32> to vector<1x8xf32>
    %8 = vector.broadcast %7 : vector<1x8xf32> to vector<16x8xf32>
    %9 = arith.addf %5, %8 : vector<16x8xf32>
    %c1 = arith.constant 1 : index
    %c0_10 = arith.constant 0 : index
    %c0_11 = arith.constant 0 : index
    %c0_12 = arith.constant 0 : index
    %10 = vector.load %arg2[%c1, %c0_10, %c0_11, %c0_12] : memref<3x4x32x8xbf16, #tpu.memory_space<vmem>>, vector<1x1x32x8xbf16>
    %11 = vector.shape_cast %10 : vector<1x1x32x8xbf16> to vector<32x8xbf16>
    %cst_13 = arith.constant dense<0.000000e+00> : vector<16x8xf32>
    %12 = tpu.matmul %1, %11, %cst_13 {dimension_numbers = #tpu.dot_dimension_numbers<[1], [0], [0], [1], [0, 0, 1, 1], [], []>} : vector<16x32xbf16>, vector<32x8xbf16>, vector<16x8xf32> -> vector<16x8xf32>
    %c1_14 = arith.constant 1 : index
    %c0_15 = arith.constant 0 : index
    %c0_16 = arith.constant 0 : index
    %c0_17 = arith.constant 0 : index
    %13 = vector.load %arg3[%c1_14, %c0_15, %c0_16, %c0_17] : memref<3x4x1x8xf32, #tpu.memory_space<vmem>>, vector<1x1x1x8xf32>
    %14 = vector.shape_cast %13 : vector<1x1x1x8xf32> to vector<1x8xf32>
    %15 = vector.broadcast %14 : vector<1x8xf32> to vector<16x8xf32>
    %16 = arith.addf %12, %15 : vector<16x8xf32>
    %c2 = arith.constant 2 : index
    %c0_18 = arith.constant 0 : index
    %c0_19 = arith.constant 0 : index
    %c0_20 = arith.constant 0 : index
    %17 = vector.load %arg2[%c2, %c0_18, %c0_19, %c0_20] : memref<3x4x32x8xbf16, #tpu.memory_space<vmem>>, vector<1x1x32x8xbf16>
    %18 = vector.shape_cast %17 : vector<1x1x32x8xbf16> to vector<32x8xbf16>
    %cst_21 = arith.constant dense<0.000000e+00> : vector<16x8xf32>
    %19 = tpu.matmul %1, %18, %cst_21 {dimension_numbers = #tpu.dot_dimension_numbers<[1], [0], [0], [1], [0, 0, 1, 1], [], []>} : vector<16x32xbf16>, vector<32x8xbf16>, vector<16x8xf32> -> vector<16x8xf32>
    %c2_22 = arith.constant 2 : index
    %c0_23 = arith.constant 0 : index
    %c0_24 = arith.constant 0 : index
    %c0_25 = arith.constant 0 : index
    %20 = vector.load %arg3[%c2_22, %c0_23, %c0_24, %c0_25] : memref<3x4x1x8xf32, #tpu.memory_space<vmem>>, vector<1x1x1x8xf32>
    %21 = vector.shape_cast %20 : vector<1x1x1x8xf32> to vector<1x8xf32>
    %22 = vector.broadcast %21 : vector<1x8xf32> to vector<16x8xf32>
    %23 = arith.addf %19, %22 : vector<16x8xf32>
    %24 = arith.truncf %9 : vector<16x8xf32> to vector<16x8xbf16>
    %25 = arith.truncf %16 : vector<16x8xf32> to vector<16x8xbf16>
    %cst_26 = arith.constant dense<0.000000e+00> : vector<16x16xf32>
    %26 = tpu.matmul %24, %25, %cst_26 {dimension_numbers = #tpu.dot_dimension_numbers<[1], [1], [0], [0], [0, 0, 1, 0], [], []>} : vector<16x8xbf16>, vector<16x8xbf16>, vector<16x16xf32> -> vector<16x16xf32>
    %cst_27 = arith.constant 0.353553385 : f32
    %27 = vector.broadcast %cst_27 : f32 to vector<16x16xf32>
    %28 = arith.mulf %26, %27 : vector<16x16xf32>
    %cst_28 = arith.constant dense<0xFF800000> : vector<16xf32>
    %29 = vector.multi_reduction <maximumf>, %28, %cst_28 [1] : vector<16x16xf32> to vector<16xf32>
    %30 = vector.shape_cast %29 : vector<16xf32> to vector<16x1xf32>
    %31 = vector.broadcast %30 : vector<16x1xf32> to vector<16x16xf32>
    %32 = arith.subf %28, %31 : vector<16x16xf32>
    %33 = math.exp %32 : vector<16x16xf32>
    %cst_29 = arith.constant dense<0.000000e+00> : vector<16xf32>
    %34 = vector.multi_reduction <add>, %33, %cst_29 [1] : vector<16x16xf32> to vector<16xf32>
    %35 = vector.shape_cast %34 : vector<16xf32> to vector<16x1xf32>
    %36 = tpu.reciprocal %35 {approx = true} : vector<16x1xf32> -> vector<16x1xf32>
    %37 = vector.broadcast %36 : vector<16x1xf32> to vector<16x16xf32>
    %38 = arith.mulf %33, %37 : vector<16x16xf32>
    %39 = arith.truncf %38 : vector<16x16xf32> to vector<16x16xbf16>
    %40 = arith.truncf %23 : vector<16x8xf32> to vector<16x8xbf16>
    %cst_30 = arith.constant dense<0.000000e+00> : vector<16x8xf32>
    %41 = tpu.matmul %39, %40, %cst_30 {dimension_numbers = #tpu.dot_dimension_numbers<[1], [0], [0], [1], [0, 0, 1, 1], [], []>} : vector<16x16xbf16>, vector<16x8xbf16>, vector<16x8xf32> -> vector<16x8xf32>
    %42 = arith.truncf %41 : vector<16x8xf32> to vector<16x8xbf16>
    %c0_31 = arith.constant 0 : index
    %c0_32 = arith.constant 0 : index
    %c0_33 = arith.constant 0 : index
    %43 = vector.load %arg4[%c0_31, %c0_32, %c0_33] : memref<4x8x32xbf16, #tpu.memory_space<vmem>>, vector<1x8x32xbf16>
    %44 = vector.shape_cast %43 : vector<1x8x32xbf16> to vector<8x32xbf16>
    %cst_34 = arith.constant dense<0.000000e+00> : vector<16x32xf32>
    %45 = tpu.matmul %42, %44, %cst_34 {dimension_numbers = #tpu.dot_dimension_numbers<[1], [0], [0], [1], [0, 0, 1, 1], [], []>} : vector<16x8xbf16>, vector<8x32xbf16>, vector<16x32xf32> -> vector<16x32xf32>
    %46 = arith.addf %2, %45 : vector<16x32xf32>
    %c0_35 = arith.constant 0 : index
    %c1_36 = arith.constant 1 : index
    %c0_37 = arith.constant 0 : index
    %c0_38 = arith.constant 0 : index
    %47 = vector.load %arg2[%c0_35, %c1_36, %c0_37, %c0_38] : memref<3x4x32x8xbf16, #tpu.memory_space<vmem>>, vector<1x1x32x8xbf16>
    %48 = vector.shape_cast %47 : vector<1x1x32x8xbf16> to vector<32x8xbf16>
    %cst_39 = arith.constant dense<0.000000e+00> : vector<16x8xf32>
    %49 = tpu.matmul %1, %48, %cst_39 {dimension_numbers = #tpu.dot_dimension_numbers<[1], [0], [0], [1], [0, 0, 1, 1], [], []>} : vector<16x32xbf16>, vector<32x8xbf16>, vector<16x8xf32> -> vector<16x8xf32>
    %c0_40 = arith.constant 0 : index
    %c1_41 = arith.constant 1 : index
    %c0_42 = arith.constant 0 : index
    %c0_43 = arith.constant 0 : index
    %50 = vector.load %arg3[%c0_40, %c1_41, %c0_42, %c0_43] : memref<3x4x1x8xf32, #tpu.memory_space<vmem>>, vector<1x1x1x8xf32>
    %51 = vector.shape_cast %50 : vector<1x1x1x8xf32> to vector<1x8xf32>
    %52 = vector.broadcast %51 : vector<1x8xf32> to vector<16x8xf32>
    %53 = arith.addf %49, %52 : vector<16x8xf32>
    %c1_44 = arith.constant 1 : index
    %c1_45 = arith.constant 1 : index
    %c0_46 = arith.constant 0 : index
    %c0_47 = arith.constant 0 : index
    %54 = vector.load %arg2[%c1_44, %c1_45, %c0_46, %c0_47] : memref<3x4x32x8xbf16, #tpu.memory_space<vmem>>, vector<1x1x32x8xbf16>
    %55 = vector.shape_cast %54 : vector<1x1x32x8xbf16> to vector<32x8xbf16>
    %cst_48 = arith.constant dense<0.000000e+00> : vector<16x8xf32>
    %56 = tpu.matmul %1, %55, %cst_48 {dimension_numbers = #tpu.dot_dimension_numbers<[1], [0], [0], [1], [0, 0, 1, 1], [], []>} : vector<16x32xbf16>, vector<32x8xbf16>, vector<16x8xf32> -> vector<16x8xf32>
    %c1_49 = arith.constant 1 : index
    %c1_50 = arith.constant 1 : index
    %c0_51 = arith.constant 0 : index
    %c0_52 = arith.constant 0 : index
    %57 = vector.load %arg3[%c1_49, %c1_50, %c0_51, %c0_52] : memref<3x4x1x8xf32, #tpu.memory_space<vmem>>, vector<1x1x1x8xf32>
    %58 = vector.shape_cast %57 : vector<1x1x1x8xf32> to vector<1x8xf32>
    %59 = vector.broadcast %58 : vector<1x8xf32> to vector<16x8xf32>
    %60 = arith.addf %56, %59 : vector<16x8xf32>
    %c2_53 = arith.constant 2 : index
    %c1_54 = arith.constant 1 : index
    %c0_55 = arith.constant 0 : index
    %c0_56 = arith.constant 0 : index
    %61 = vector.load %arg2[%c2_53, %c1_54, %c0_55, %c0_56] : memref<3x4x32x8xbf16, #tpu.memory_space<vmem>>, vector<1x1x32x8xbf16>
    %62 = vector.shape_cast %61 : vector<1x1x32x8xbf16> to vector<32x8xbf16>
    %cst_57 = arith.constant dense<0.000000e+00> : vector<16x8xf32>
    %63 = tpu.matmul %1, %62, %cst_57 {dimension_numbers = #tpu.dot_dimension_numbers<[1], [0], [0], [1], [0, 0, 1, 1], [], []>} : vector<16x32xbf16>, vector<32x8xbf16>, vector<16x8xf32> -> vector<16x8xf32>
    %c2_58 = arith.constant 2 : index
    %c1_59 = arith.constant 1 : index
    %c0_60 = arith.constant 0 : index
    %c0_61 = arith.constant 0 : index
    %64 = vector.load %arg3[%c2_58, %c1_59, %c0_60, %c0_61] : memref<3x4x1x8xf32, #tpu.memory_space<vmem>>, vector<1x1x1x8xf32>
    %65 = vector.shape_cast %64 : vector<1x1x1x8xf32> to vector<1x8xf32>
    %66 = vector.broadcast %65 : vector<1x8xf32> to vector<16x8xf32>
    %67 = arith.addf %63, %66 : vector<16x8xf32>
    %68 = arith.truncf %53 : vector<16x8xf32> to vector<16x8xbf16>
    %69 = arith.truncf %60 : vector<16x8xf32> to vector<16x8xbf16>
    %cst_62 = arith.constant dense<0.000000e+00> : vector<16x16xf32>
    %70 = tpu.matmul %68, %69, %cst_62 {dimension_numbers = #tpu.dot_dimension_numbers<[1], [1], [0], [0], [0, 0, 1, 0], [], []>} : vector<16x8xbf16>, vector<16x8xbf16>, vector<16x16xf32> -> vector<16x16xf32>
    %cst_63 = arith.constant 0.353553385 : f32
    %71 = vector.broadcast %cst_63 : f32 to vector<16x16xf32>
    %72 = arith.mulf %70, %71 : vector<16x16xf32>
    %cst_64 = arith.constant dense<0xFF800000> : vector<16xf32>
    %73 = vector.multi_reduction <maximumf>, %72, %cst_64 [1] : vector<16x16xf32> to vector<16xf32>
    %74 = vector.shape_cast %73 : vector<16xf32> to vector<16x1xf32>
    %75 = vector.broadcast %74 : vector<16x1xf32> to vector<16x16xf32>
    %76 = arith.subf %72, %75 : vector<16x16xf32>
    %77 = math.exp %76 : vector<16x16xf32>
    %cst_65 = arith.constant dense<0.000000e+00> : vector<16xf32>
    %78 = vector.multi_reduction <add>, %77, %cst_65 [1] : vector<16x16xf32> to vector<16xf32>
    %79 = vector.shape_cast %78 : vector<16xf32> to vector<16x1xf32>
    %80 = tpu.reciprocal %79 {approx = true} : vector<16x1xf32> -> vector<16x1xf32>
    %81 = vector.broadcast %80 : vector<16x1xf32> to vector<16x16xf32>
    %82 = arith.mulf %77, %81 : vector<16x16xf32>
    %83 = arith.truncf %82 : vector<16x16xf32> to vector<16x16xbf16>
    %84 = arith.truncf %67 : vector<16x8xf32> to vector<16x8xbf16>
    %cst_66 = arith.constant dense<0.000000e+00> : vector<16x8xf32>
    %85 = tpu.matmul %83, %84, %cst_66 {dimension_numbers = #tpu.dot_dimension_numbers<[1], [0], [0], [1], [0, 0, 1, 1], [], []>} : vector<16x16xbf16>, vector<16x8xbf16>, vector<16x8xf32> -> vector<16x8xf32>
    %86 = arith.truncf %85 : vector<16x8xf32> to vector<16x8xbf16>
    %c1_67 = arith.constant 1 : index
    %c0_68 = arith.constant 0 : index
    %c0_69 = arith.constant 0 : index
    %87 = vector.load %arg4[%c1_67, %c0_68, %c0_69] : memref<4x8x32xbf16, #tpu.memory_space<vmem>>, vector<1x8x32xbf16>
    %88 = vector.shape_cast %87 : vector<1x8x32xbf16> to vector<8x32xbf16>
    %cst_70 = arith.constant dense<0.000000e+00> : vector<16x32xf32>
    %89 = tpu.matmul %86, %88, %cst_70 {dimension_numbers = #tpu.dot_dimension_numbers<[1], [0], [0], [1], [0, 0, 1, 1], [], []>} : vector<16x8xbf16>, vector<8x32xbf16>, vector<16x32xf32> -> vector<16x32xf32>
    %90 = arith.addf %46, %89 : vector<16x32xf32>
    %c0_71 = arith.constant 0 : index
    %c2_72 = arith.constant 2 : index
    %c0_73 = arith.constant 0 : index
    %c0_74 = arith.constant 0 : index
    %91 = vector.load %arg2[%c0_71, %c2_72, %c0_73, %c0_74] : memref<3x4x32x8xbf16, #tpu.memory_space<vmem>>, vector<1x1x32x8xbf16>
    %92 = vector.shape_cast %91 : vector<1x1x32x8xbf16> to vector<32x8xbf16>
    %cst_75 = arith.constant dense<0.000000e+00> : vector<16x8xf32>
    %93 = tpu.matmul %1, %92, %cst_75 {dimension_numbers = #tpu.dot_dimension_numbers<[1], [0], [0], [1], [0, 0, 1, 1], [], []>} : vector<16x32xbf16>, vector<32x8xbf16>, vector<16x8xf32> -> vector<16x8xf32>
    %c0_76 = arith.constant 0 : index
    %c2_77 = arith.constant 2 : index
    %c0_78 = arith.constant 0 : index
    %c0_79 = arith.constant 0 : index
    %94 = vector.load %arg3[%c0_76, %c2_77, %c0_78, %c0_79] : memref<3x4x1x8xf32, #tpu.memory_space<vmem>>, vector<1x1x1x8xf32>
    %95 = vector.shape_cast %94 : vector<1x1x1x8xf32> to vector<1x8xf32>
    %96 = vector.broadcast %95 : vector<1x8xf32> to vector<16x8xf32>
    %97 = arith.addf %93, %96 : vector<16x8xf32>
    %c1_80 = arith.constant 1 : index
    %c2_81 = arith.constant 2 : index
    %c0_82 = arith.constant 0 : index
    %c0_83 = arith.constant 0 : index
    %98 = vector.load %arg2[%c1_80, %c2_81, %c0_82, %c0_83] : memref<3x4x32x8xbf16, #tpu.memory_space<vmem>>, vector<1x1x32x8xbf16>
    %99 = vector.shape_cast %98 : vector<1x1x32x8xbf16> to vector<32x8xbf16>
    %cst_84 = arith.constant dense<0.000000e+00> : vector<16x8xf32>
    %100 = tpu.matmul %1, %99, %cst_84 {dimension_numbers = #tpu.dot_dimension_numbers<[1], [0], [0], [1], [0, 0, 1, 1], [], []>} : vector<16x32xbf16>, vector<32x8xbf16>, vector<16x8xf32> -> vector<16x8xf32>
    %c1_85 = arith.constant 1 : index
    %c2_86 = arith.constant 2 : index
    %c0_87 = arith.constant 0 : index
    %c0_88 = arith.constant 0 : index
    %101 = vector.load %arg3[%c1_85, %c2_86, %c0_87, %c0_88] : memref<3x4x1x8xf32, #tpu.memory_space<vmem>>, vector<1x1x1x8xf32>
    %102 = vector.shape_cast %101 : vector<1x1x1x8xf32> to vector<1x8xf32>
    %103 = vector.broadcast %102 : vector<1x8xf32> to vector<16x8xf32>
    %104 = arith.addf %100, %103 : vector<16x8xf32>
    %c2_89 = arith.constant 2 : index
    %c2_90 = arith.constant 2 : index
    %c0_91 = arith.constant 0 : index
    %c0_92 = arith.constant 0 : index
    %105 = vector.load %arg2[%c2_89, %c2_90, %c0_91, %c0_92] : memref<3x4x32x8xbf16, #tpu.memory_space<vmem>>, vector<1x1x32x8xbf16>
    %106 = vector.shape_cast %105 : vector<1x1x32x8xbf16> to vector<32x8xbf16>
    %cst_93 = arith.constant dense<0.000000e+00> : vector<16x8xf32>
    %107 = tpu.matmul %1, %106, %cst_93 {dimension_numbers = #tpu.dot_dimension_numbers<[1], [0], [0], [1], [0, 0, 1, 1], [], []>} : vector<16x32xbf16>, vector<32x8xbf16>, vector<16x8xf32> -> vector<16x8xf32>
    %c2_94 = arith.constant 2 : index
    %c2_95 = arith.constant 2 : index
    %c0_96 = arith.constant 0 : index
    %c0_97 = arith.constant 0 : index
    %108 = vector.load %arg3[%c2_94, %c2_95, %c0_96, %c0_97] : memref<3x4x1x8xf32, #tpu.memory_space<vmem>>, vector<1x1x1x8xf32>
    %109 = vector.shape_cast %108 : vector<1x1x1x8xf32> to vector<1x8xf32>
    %110 = vector.broadcast %109 : vector<1x8xf32> to vector<16x8xf32>
    %111 = arith.addf %107, %110 : vector<16x8xf32>
    %112 = arith.truncf %97 : vector<16x8xf32> to vector<16x8xbf16>
    %113 = arith.truncf %104 : vector<16x8xf32> to vector<16x8xbf16>
    %cst_98 = arith.constant dense<0.000000e+00> : vector<16x16xf32>
    %114 = tpu.matmul %112, %113, %cst_98 {dimension_numbers = #tpu.dot_dimension_numbers<[1], [1], [0], [0], [0, 0, 1, 0], [], []>} : vector<16x8xbf16>, vector<16x8xbf16>, vector<16x16xf32> -> vector<16x16xf32>
    %cst_99 = arith.constant 0.353553385 : f32
    %115 = vector.broadcast %cst_99 : f32 to vector<16x16xf32>
    %116 = arith.mulf %114, %115 : vector<16x16xf32>
    %cst_100 = arith.constant dense<0xFF800000> : vector<16xf32>
    %117 = vector.multi_reduction <maximumf>, %116, %cst_100 [1] : vector<16x16xf32> to vector<16xf32>
    %118 = vector.shape_cast %117 : vector<16xf32> to vector<16x1xf32>
    %119 = vector.broadcast %118 : vector<16x1xf32> to vector<16x16xf32>
    %120 = arith.subf %116, %119 : vector<16x16xf32>
    %121 = math.exp %120 : vector<16x16xf32>
    %cst_101 = arith.constant dense<0.000000e+00> : vector<16xf32>
    %122 = vector.multi_reduction <add>, %121, %cst_101 [1] : vector<16x16xf32> to vector<16xf32>
    %123 = vector.shape_cast %122 : vector<16xf32> to vector<16x1xf32>
    %124 = tpu.reciprocal %123 {approx = true} : vector<16x1xf32> -> vector<16x1xf32>
    %125 = vector.broadcast %124 : vector<16x1xf32> to vector<16x16xf32>
    %126 = arith.mulf %121, %125 : vector<16x16xf32>
    %127 = arith.truncf %126 : vector<16x16xf32> to vector<16x16xbf16>
    %128 = arith.truncf %111 : vector<16x8xf32> to vector<16x8xbf16>
    %cst_102 = arith.constant dense<0.000000e+00> : vector<16x8xf32>
    %129 = tpu.matmul %127, %128, %cst_102 {dimension_numbers = #tpu.dot_dimension_numbers<[1], [0], [0], [1], [0, 0, 1, 1], [], []>} : vector<16x16xbf16>, vector<16x8xbf16>, vector<16x8xf32> -> vector<16x8xf32>
    %130 = arith.truncf %129 : vector<16x8xf32> to vector<16x8xbf16>
    %c2_103 = arith.constant 2 : index
    %c0_104 = arith.constant 0 : index
    %c0_105 = arith.constant 0 : index
    %131 = vector.load %arg4[%c2_103, %c0_104, %c0_105] : memref<4x8x32xbf16, #tpu.memory_space<vmem>>, vector<1x8x32xbf16>
    %132 = vector.shape_cast %131 : vector<1x8x32xbf16> to vector<8x32xbf16>
    %cst_106 = arith.constant dense<0.000000e+00> : vector<16x32xf32>
    %133 = tpu.matmul %130, %132, %cst_106 {dimension_numbers = #tpu.dot_dimension_numbers<[1], [0], [0], [1], [0, 0, 1, 1], [], []>} : vector<16x8xbf16>, vector<8x32xbf16>, vector<16x32xf32> -> vector<16x32xf32>
    %134 = arith.addf %90, %133 : vector<16x32xf32>
    %c0_107 = arith.constant 0 : index
    %c3 = arith.constant 3 : index
    %c0_108 = arith.constant 0 : index
    %c0_109 = arith.constant 0 : index
    %135 = vector.load %arg2[%c0_107, %c3, %c0_108, %c0_109] : memref<3x4x32x8xbf16, #tpu.memory_space<vmem>>, vector<1x1x32x8xbf16>
    %136 = vector.shape_cast %135 : vector<1x1x32x8xbf16> to vector<32x8xbf16>
    %cst_110 = arith.constant dense<0.000000e+00> : vector<16x8xf32>
    %137 = tpu.matmul %1, %136, %cst_110 {dimension_numbers = #tpu.dot_dimension_numbers<[1], [0], [0], [1], [0, 0, 1, 1], [], []>} : vector<16x32xbf16>, vector<32x8xbf16>, vector<16x8xf32> -> vector<16x8xf32>
    %c0_111 = arith.constant 0 : index
    %c3_112 = arith.constant 3 : index
    %c0_113 = arith.constant 0 : index
    %c0_114 = arith.constant 0 : index
    %138 = vector.load %arg3[%c0_111, %c3_112, %c0_113, %c0_114] : memref<3x4x1x8xf32, #tpu.memory_space<vmem>>, vector<1x1x1x8xf32>
    %139 = vector.shape_cast %138 : vector<1x1x1x8xf32> to vector<1x8xf32>
    %140 = vector.broadcast %139 : vector<1x8xf32> to vector<16x8xf32>
    %141 = arith.addf %137, %140 : vector<16x8xf32>
    %c1_115 = arith.constant 1 : index
    %c3_116 = arith.constant 3 : index
    %c0_117 = arith.constant 0 : index
    %c0_118 = arith.constant 0 : index
    %142 = vector.load %arg2[%c1_115, %c3_116, %c0_117, %c0_118] : memref<3x4x32x8xbf16, #tpu.memory_space<vmem>>, vector<1x1x32x8xbf16>
    %143 = vector.shape_cast %142 : vector<1x1x32x8xbf16> to vector<32x8xbf16>
    %cst_119 = arith.constant dense<0.000000e+00> : vector<16x8xf32>
    %144 = tpu.matmul %1, %143, %cst_119 {dimension_numbers = #tpu.dot_dimension_numbers<[1], [0], [0], [1], [0, 0, 1, 1], [], []>} : vector<16x32xbf16>, vector<32x8xbf16>, vector<16x8xf32> -> vector<16x8xf32>
    %c1_120 = arith.constant 1 : index
    %c3_121 = arith.constant 3 : index
    %c0_122 = arith.constant 0 : index
    %c0_123 = arith.constant 0 : index
    %145 = vector.load %arg3[%c1_120, %c3_121, %c0_122, %c0_123] : memref<3x4x1x8xf32, #tpu.memory_space<vmem>>, vector<1x1x1x8xf32>
    %146 = vector.shape_cast %145 : vector<1x1x1x8xf32> to vector<1x8xf32>
    %147 = vector.broadcast %146 : vector<1x8xf32> to vector<16x8xf32>
    %148 = arith.addf %144, %147 : vector<16x8xf32>
    %c2_124 = arith.constant 2 : index
    %c3_125 = arith.constant 3 : index
    %c0_126 = arith.constant 0 : index
    %c0_127 = arith.constant 0 : index
    %149 = vector.load %arg2[%c2_124, %c3_125, %c0_126, %c0_127] : memref<3x4x32x8xbf16, #tpu.memory_space<vmem>>, vector<1x1x32x8xbf16>
    %150 = vector.shape_cast %149 : vector<1x1x32x8xbf16> to vector<32x8xbf16>
    %cst_128 = arith.constant dense<0.000000e+00> : vector<16x8xf32>
    %151 = tpu.matmul %1, %150, %cst_128 {dimension_numbers = #tpu.dot_dimension_numbers<[1], [0], [0], [1], [0, 0, 1, 1], [], []>} : vector<16x32xbf16>, vector<32x8xbf16>, vector<16x8xf32> -> vector<16x8xf32>
    %c2_129 = arith.constant 2 : index
    %c3_130 = arith.constant 3 : index
    %c0_131 = arith.constant 0 : index
    %c0_132 = arith.constant 0 : index
    %152 = vector.load %arg3[%c2_129, %c3_130, %c0_131, %c0_132] : memref<3x4x1x8xf32, #tpu.memory_space<vmem>>, vector<1x1x1x8xf32>
    %153 = vector.shape_cast %152 : vector<1x1x1x8xf32> to vector<1x8xf32>
    %154 = vector.broadcast %153 : vector<1x8xf32> to vector<16x8xf32>
    %155 = arith.addf %151, %154 : vector<16x8xf32>
    %156 = arith.truncf %141 : vector<16x8xf32> to vector<16x8xbf16>
    %157 = arith.truncf %148 : vector<16x8xf32> to vector<16x8xbf16>
    %cst_133 = arith.constant dense<0.000000e+00> : vector<16x16xf32>
    %158 = tpu.matmul %156, %157, %cst_133 {dimension_numbers = #tpu.dot_dimension_numbers<[1], [1], [0], [0], [0, 0, 1, 0], [], []>} : vector<16x8xbf16>, vector<16x8xbf16>, vector<16x16xf32> -> vector<16x16xf32>
    %cst_134 = arith.constant 0.353553385 : f32
    %159 = vector.broadcast %cst_134 : f32 to vector<16x16xf32>
    %160 = arith.mulf %158, %159 : vector<16x16xf32>
    %cst_135 = arith.constant dense<0xFF800000> : vector<16xf32>
    %161 = vector.multi_reduction <maximumf>, %160, %cst_135 [1] : vector<16x16xf32> to vector<16xf32>
    %162 = vector.shape_cast %161 : vector<16xf32> to vector<16x1xf32>
    %163 = vector.broadcast %162 : vector<16x1xf32> to vector<16x16xf32>
    %164 = arith.subf %160, %163 : vector<16x16xf32>
    %165 = math.exp %164 : vector<16x16xf32>
    %cst_136 = arith.constant dense<0.000000e+00> : vector<16xf32>
    %166 = vector.multi_reduction <add>, %165, %cst_136 [1] : vector<16x16xf32> to vector<16xf32>
    %167 = vector.shape_cast %166 : vector<16xf32> to vector<16x1xf32>
    %168 = tpu.reciprocal %167 {approx = true} : vector<16x1xf32> -> vector<16x1xf32>
    %169 = vector.broadcast %168 : vector<16x1xf32> to vector<16x16xf32>
    %170 = arith.mulf %165, %169 : vector<16x16xf32>
    %171 = arith.truncf %170 : vector<16x16xf32> to vector<16x16xbf16>
    %172 = arith.truncf %155 : vector<16x8xf32> to vector<16x8xbf16>
    %cst_137 = arith.constant dense<0.000000e+00> : vector<16x8xf32>
    %173 = tpu.matmul %171, %172, %cst_137 {dimension_numbers = #tpu.dot_dimension_numbers<[1], [0], [0], [1], [0, 0, 1, 1], [], []>} : vector<16x16xbf16>, vector<16x8xbf16>, vector<16x8xf32> -> vector<16x8xf32>
    %174 = arith.truncf %173 : vector<16x8xf32> to vector<16x8xbf16>
    %c3_138 = arith.constant 3 : index
    %c0_139 = arith.constant 0 : index
    %c0_140 = arith.constant 0 : index
    %175 = vector.load %arg4[%c3_138, %c0_139, %c0_140] : memref<4x8x32xbf16, #tpu.memory_space<vmem>>, vector<1x8x32xbf16>
    %176 = vector.shape_cast %175 : vector<1x8x32xbf16> to vector<8x32xbf16>
    %cst_141 = arith.constant dense<0.000000e+00> : vector<16x32xf32>
    %177 = tpu.matmul %174, %176, %cst_141 {dimension_numbers = #tpu.dot_dimension_numbers<[1], [0], [0], [1], [0, 0, 1, 1], [], []>} : vector<16x8xbf16>, vector<8x32xbf16>, vector<16x32xf32> -> vector<16x32xf32>
    %178 = arith.addf %134, %177 : vector<16x32xf32>
    %c0_142 = arith.constant 0 : index
    %c0_143 = arith.constant 0 : index
    %179 = vector.load %arg5[%c0_142, %c0_143] : memref<1x32xf32, #tpu.memory_space<vmem>>, vector<1x32xf32>
    %180 = vector.broadcast %179 : vector<1x32xf32> to vector<16x32xf32>
    %181 = arith.addf %178, %180 : vector<16x32xf32>
    %182 = arith.addf %0, %181 : vector<16x32xf32>
    %cst_144 = arith.constant dense<0.000000e+00> : vector<16xf32>
    %183 = vector.multi_reduction <add>, %182, %cst_144 [1] : vector<16x32xf32> to vector<16xf32>
    %184 = vector.shape_cast %183 : vector<16xf32> to vector<16x1xf32>
    %cst_145 = arith.constant 3.200000e+01 : f32
    %185 = vector.broadcast %cst_145 : f32 to vector<16x1xf32>
    %186 = arith.divf %184, %185 : vector<16x1xf32>
    %187 = vector.broadcast %186 : vector<16x1xf32> to vector<16x32xf32>
    %188 = arith.subf %182, %187 : vector<16x32xf32>
    %189 = arith.mulf %188, %188 : vector<16x32xf32>
    %cst_146 = arith.constant dense<0.000000e+00> : vector<16xf32>
    %190 = vector.multi_reduction <add>, %189, %cst_146 [1] : vector<16x32xf32> to vector<16xf32>
    %191 = vector.shape_cast %190 : vector<16xf32> to vector<16x1xf32>
    %cst_147 = arith.constant 3.200000e+01 : f32
    %192 = vector.broadcast %cst_147 : f32 to vector<16x1xf32>
    %193 = arith.divf %191, %192 : vector<16x1xf32>
    %194 = vector.broadcast %186 : vector<16x1xf32> to vector<16x32xf32>
    %195 = arith.subf %182, %194 : vector<16x32xf32>
    %cst_148 = arith.constant 9.99999974E-6 : f32
    %196 = vector.broadcast %cst_148 : f32 to vector<16x1xf32>
    %197 = arith.addf %193, %196 : vector<16x1xf32>
    %198 = math.rsqrt %197 : vector<16x1xf32>
    %199 = vector.broadcast %198 : vector<16x1xf32> to vector<16x32xf32>
    %200 = arith.mulf %195, %199 : vector<16x32xf32>
    %c0_149 = arith.constant 0 : index
    %c0_150 = arith.constant 0 : index
    %201 = vector.load %arg6[%c0_149, %c0_150] : memref<1x32xf32, #tpu.memory_space<vmem>>, vector<1x32xf32>
    %202 = vector.broadcast %201 : vector<1x32xf32> to vector<16x32xf32>
    %203 = arith.mulf %200, %202 : vector<16x32xf32>
    %c0_151 = arith.constant 0 : index
    %c0_152 = arith.constant 0 : index
    %204 = vector.load %arg7[%c0_151, %c0_152] : memref<1x32xf32, #tpu.memory_space<vmem>>, vector<1x32xf32>
    %205 = vector.broadcast %204 : vector<1x32xf32> to vector<16x32xf32>
    %206 = arith.addf %203, %205 : vector<16x32xf32>
    %207 = arith.truncf %206 : vector<16x32xf32> to vector<16x32xbf16>
    %c0_153 = arith.constant 0 : index
    %c0_154 = arith.constant 0 : index
    %208 = vector.load %arg8[%c0_153, %c0_154] : memref<32x64xbf16, #tpu.memory_space<vmem>>, vector<32x64xbf16>
    %cst_155 = arith.constant dense<0.000000e+00> : vector<16x64xf32>
    %209 = tpu.matmul %207, %208, %cst_155 {dimension_numbers = #tpu.dot_dimension_numbers<[1], [0], [0], [1], [0, 0, 1, 1], [], []>} : vector<16x32xbf16>, vector<32x64xbf16>, vector<16x64xf32> -> vector<16x64xf32>
    %c0_156 = arith.constant 0 : index
    %c0_157 = arith.constant 0 : index
    %210 = vector.load %arg9[%c0_156, %c0_157] : memref<1x64xf32, #tpu.memory_space<vmem>>, vector<1x64xf32>
    %211 = vector.broadcast %210 : vector<1x64xf32> to vector<16x64xf32>
    %212 = arith.addf %209, %211 : vector<16x64xf32>
    %cst_158 = arith.constant 0.000000e+00 : f32
    %213 = vector.broadcast %cst_158 : f32 to vector<16x64xf32>
    %214 = arith.maximumf %212, %213 : vector<16x64xf32>
    %215 = arith.truncf %214 : vector<16x64xf32> to vector<16x64xbf16>
    %c0_159 = arith.constant 0 : index
    %c0_160 = arith.constant 0 : index
    %216 = vector.load %arg10[%c0_159, %c0_160] : memref<64x32xbf16, #tpu.memory_space<vmem>>, vector<64x32xbf16>
    %cst_161 = arith.constant dense<0.000000e+00> : vector<16x32xf32>
    %217 = tpu.matmul %215, %216, %cst_161 {dimension_numbers = #tpu.dot_dimension_numbers<[1], [0], [0], [1], [0, 0, 1, 1], [], []>} : vector<16x64xbf16>, vector<64x32xbf16>, vector<16x32xf32> -> vector<16x32xf32>
    %c0_162 = arith.constant 0 : index
    %c0_163 = arith.constant 0 : index
    %218 = vector.load %arg11[%c0_162, %c0_163] : memref<1x32xf32, #tpu.memory_space<vmem>>, vector<1x32xf32>
    %219 = vector.broadcast %218 : vector<1x32xf32> to vector<16x32xf32>
    %220 = arith.addf %217, %219 : vector<16x32xf32>
    %221 = arith.addf %206, %220 : vector<16x32xf32>
    %cst_164 = arith.constant dense<0.000000e+00> : vector<16xf32>
    %222 = vector.multi_reduction <add>, %221, %cst_164 [1] : vector<16x32xf32> to vector<16xf32>
    %223 = vector.shape_cast %222 : vector<16xf32> to vector<16x1xf32>
    %cst_165 = arith.constant 3.200000e+01 : f32
    %224 = vector.broadcast %cst_165 : f32 to vector<16x1xf32>
    %225 = arith.divf %223, %224 : vector<16x1xf32>
    %226 = vector.broadcast %225 : vector<16x1xf32> to vector<16x32xf32>
    %227 = arith.subf %221, %226 : vector<16x32xf32>
    %228 = arith.mulf %227, %227 : vector<16x32xf32>
    %cst_166 = arith.constant dense<0.000000e+00> : vector<16xf32>
    %229 = vector.multi_reduction <add>, %228, %cst_166 [1] : vector<16x32xf32> to vector<16xf32>
    %230 = vector.shape_cast %229 : vector<16xf32> to vector<16x1xf32>
    %cst_167 = arith.constant 3.200000e+01 : f32
    %231 = vector.broadcast %cst_167 : f32 to vector<16x1xf32>
    %232 = arith.divf %230, %231 : vector<16x1xf32>
    %233 = vector.broadcast %225 : vector<16x1xf32> to vector<16x32xf32>
    %234 = arith.subf %221, %233 : vector<16x32xf32>
    %cst_168 = arith.constant 9.99999974E-6 : f32
    %235 = vector.broadcast %cst_168 : f32 to vector<16x1xf32>
    %236 = arith.addf %232, %235 : vector<16x1xf32>
    %237 = math.rsqrt %236 : vector<16x1xf32>
    %238 = vector.broadcast %237 : vector<16x1xf32> to vector<16x32xf32>
    %239 = arith.mulf %234, %238 : vector<16x32xf32>
    %c0_169 = arith.constant 0 : index
    %c0_170 = arith.constant 0 : index
    %240 = vector.load %arg12[%c0_169, %c0_170] : memref<1x32xf32, #tpu.memory_space<vmem>>, vector<1x32xf32>
    %241 = vector.broadcast %240 : vector<1x32xf32> to vector<16x32xf32>
    %242 = arith.mulf %239, %241 : vector<16x32xf32>
    %c0_171 = arith.constant 0 : index
    %c0_172 = arith.constant 0 : index
    %243 = vector.load %arg13[%c0_171, %c0_172] : memref<1x32xf32, #tpu.memory_space<vmem>>, vector<1x32xf32>
    %244 = vector.broadcast %243 : vector<1x32xf32> to vector<16x32xf32>
    %245 = arith.addf %242, %244 : vector<16x32xf32>
    %c0_173 = arith.constant 0 : index
    %c0_174 = arith.constant 0 : index
    %246 = vector.load %arg14[%c0_173, %c0_174] : memref<16x32xf32, #tpu.memory_space<vmem>>, vector<16x32xf32>
    tpu.vector_store %arg14[%c0_173, %c0_174], %245 {strides = array<i32>} : memref<16x32xf32, #tpu.memory_space<vmem>>, vector<16x32xf32>,
    return
  }
  func.func @transform_0(%arg0: i32) -> (i32, i32) {
    %c0_i32 = arith.constant 0 : i32
    %c0_i32_0 = arith.constant 0 : i32
    %c0_i32_1 = arith.constant 0 : i32
    return %c0_i32, %c0_i32_0 : i32, i32
  }
  func.func @transform_1(%arg0: i32) -> (i32, i32, i32, i32) {
    %c0_i32 = arith.constant 0 : i32
    %c0_i32_0 = arith.constant 0 : i32
    %c0_i32_1 = arith.constant 0 : i32
    %c0_i32_2 = arith.constant 0 : i32
    %c0_i32_3 = arith.constant 0 : i32
    return %c0_i32, %c0_i32_0, %c0_i32_1, %c0_i32_2 : i32, i32, i32, i32
  }
  func.func @transform_2(%arg0: i32) -> (i32, i32, i32, i32) {
    %c0_i32 = arith.constant 0 : i32
    %c0_i32_0 = arith.constant 0 : i32
    %c0_i32_1 = arith.constant 0 : i32
    %c0_i32_2 = arith.constant 0 : i32
    %c0_i32_3 = arith.constant 0 : i32
    return %c0_i32, %c0_i32_0, %c0_i32_1, %c0_i32_2 : i32, i32, i32, i32
  }
  func.func @transform_3(%arg0: i32) -> (i32, i32, i32) {
    %c0_i32 = arith.constant 0 : i32
    %c0_i32_0 = arith.constant 0 : i32
    %c0_i32_1 = arith.constant 0 : i32
    %c0_i32_2 = arith.constant 0 : i32
    return %c0_i32, %c0_i32_0, %c0_i32_1 : i32, i32, i32
  }
  func.func @transform_4(%arg0: i32) -> (i32, i32) {
    %c0_i32 = arith.constant 0 : i32
    %c0_i32_0 = arith.constant 0 : i32
    %c0_i32_1 = arith.constant 0 : i32
    return %c0_i32, %c0_i32_0 : i32, i32
  }
  func.func @transform_5(%arg0: i32) -> (i32, i32) {
    %c0_i32 = arith.constant 0 : i32
    %c0_i32_0 = arith.constant 0 : i32
    %c0_i32_1 = arith.constant 0 : i32
    return %c0_i32, %c0_i32_0 : i32, i32
  }
  func.func @transform_6(%arg0: i32) -> (i32, i32) {
    %c0_i32 = arith.constant 0 : i32
    %c0_i32_0 = arith.constant 0 : i32
    %c0_i32_1 = arith.constant 0 : i32
    return %c0_i32, %c0_i32_0 : i32, i32
  }
  func.func @transform_7(%arg0: i32) -> (i32, i32) {
    %c0_i32 = arith.constant 0 : i32
    %c0_i32_0 = arith.constant 0 : i32
    %c0_i32_1 = arith.constant 0 : i32
    return %c0_i32, %c0_i32_0 : i32, i32
  }
  func.func @transform_8(%arg0: i32) -> (i32, i32) {
    %c0_i32 = arith.constant 0 : i32
    %c0_i32_0 = arith.constant 0 : i32
    %c0_i32_1 = arith.constant 0 : i32
    return %c0_i32, %c0_i32_0 : i32, i32
  }
  func.func @transform_9(%arg0: i32) -> (i32, i32) {
    %c0_i32 = arith.constant 0 : i32
    %c0_i32_0 = arith.constant 0 : i32
    %c0_i32_1 = arith.constant 0 : i32
    return %c0_i32, %c0_i32_0 : i32, i32
  }
  func.func @transform_10(%arg0: i32) -> (i32, i32) {
    %c0_i32 = arith.constant 0 : i32
    %c0_i32_0 = arith.constant 0 : i32
    %c0_i32_1 = arith.constant 0 : i32
    return %c0_i32, %c0_i32_0 : i32, i32
  }
  func.func @transform_11(%arg0: i32) -> (i32, i32) {
    %c0_i32 = arith.constant 0 : i32
    %c0_i32_0 = arith.constant 0 : i32
    %c0_i32_1 = arith.constant 0 : i32
    return %c0_i32, %c0_i32_0 : i32, i32
  }
  func.func @transform_12(%arg0: i32) -> (i32, i32) {
    %c0_i32 = arith.constant 0 : i32
    %c0_i32_0 = arith.constant 0 : i32
    %c0_i32_1 = arith.constant 0 : i32
    return %c0_i32, %c0_i32_0 : i32, i32
  }
  func.func @transform_13(%arg0: i32) -> (i32, i32) {
    %c0_i32 = arith.constant 0 : i32
    %c0_i32_0 = arith.constant 0 : i32
    %c0_i32_1 = arith.constant 0 : i32
    return %c0_i32, %c0_i32_0 : i32, i32
  }
}

</mosaic_0001>

<llo_original>
// kernel: _lambda_.1
$region0: #{_lambda_.1}
  #allocation0 [shape = 'u32[]', space=smem, size = 0x4, offset = 0x4, fixed_abs, tag = 'smem constant byte address 0x4 - core index']
  #allocation1 [shape = 'u32[144,128]{1,0:T(1,128)}', space=vmem, size = 0x12000, scoped, tag = 'internal scratch']
  #allocation2 [shape = 'f32[1,1]{1,0:T(1,128)S(1)}', space=vmem, size = 0x200, scoped, tag = 'scoped memory for _lambda_.1']
  %s0 = inlined_call_operand.vmem [shape: f32[16,32], index: 0, kind: input, shape index: {}]
  %s1 = inlined_call_operand.hbm [shape: bf16[3,32,32], index: 1, kind: input, shape index: {}]
  %s2 = inlined_call_operand.vmem [shape: f32[1,32], index: 2, kind: input, shape index: {}]
  %s3 = inlined_call_operand.vmem [shape: f32[1,32], index: 3, kind: input, shape index: {}]
  %s4 = inlined_call_operand.vmem [shape: f32[1,32], index: 4, kind: input, shape index: {}]
  %s5 = inlined_call_operand.<no memory space> [shape: f32[1,1], index: 5, kind: input, shape index: {}]
  %s6 = inlined_call_operand.hbm [shape: f32[1,1], index: 6, kind: output, shape index: {}]
  %s7 = sld [smem:[#allocation0]]
  $region38: #{_lambda_.1} parent=0
    _
  %s9 = ssub.s32 1, %s7
  %s10 = scalar_select 0, %s9, %s7
  %v11 = vstv %s5
  %12 = vst [vmem:[#allocation2] sm:$0x1] %v11
  $region1: #{_lambda_.1} parent=0
    #allocation3 [shape = 'u8[24576]{0}', space=vmem, size = 0x6000, scoped, tag = 'input window, operand 1, single buffered']
    #allocation4 [shape = 's32[1]{0}', space=sflag, size = 0x4, scoped, tag = 'scoped memory for _lambda_.1']
    #allocation5 [shape = 's32[1]{0}', space=sflag, size = 0x4, scoped, tag = 'scoped memory for _lambda_.1']
    #allocation6 [shape = 'u8[512]{0}', space=vmem, size = 0x400, scoped, tag = 'output window, operand 0, single buffered']
    %13 = vsyncpa [#allocation4], 0
    %14 = vsyncpa [#allocation5], 0
    // Predicated region
    $region2: #{_lambda_.1} parent=1 // pred_check
      _
    $region3: #{_lambda_.1} parent=1 // pred_check_branch
      %16 = sbr.rel (0) target = $region5
    $region4: #{_lambda_.1} parent=1 // pred_region
      _
    $region5: #{_lambda_.1} parent=1 // pred_fallthru
      _
    // Predicated region
    $region6: #{_lambda_.1} parent=1 // pred_check
      _
    $region7: #{_lambda_.1} parent=1 // pred_check_branch
      %18 = sbr.rel (0) target = $region9
    $region8: #{_lambda_.1} parent=1 // pred_region
      %s20 = ssub.s32 768, 768
      %21 = vsyncadd [#allocation4], %s20
      %s22 = sshll.u32 [#allocation3], 4
      %s23 = int_to_ptr.vmem [resolvable:$true] %s22
      %28 = dma.hbm_to_vmem [thread:$0]  %s1, 768, %s23, [#allocation4], 64, 64, 4
    $region9: #{_lambda_.1} parent=1 // pred_fallthru
      _
    // Predicated region
    $region10: #{_lambda_.1} parent=1 // pred_check
      _
    $region11: #{_lambda_.1} parent=1 // pred_check_branch
      %30 = sbr.rel (0) target = $region13
    $region12: #{_lambda_.1} parent=1 // pred_region
      _
    $region13: #{_lambda_.1} parent=1 // pred_fallthru
      _
    // Predicated region
    $region14: #{_lambda_.1} parent=1 // pred_check
      _
    $region15: #{_lambda_.1} parent=1 // pred_check_branch
      %32 = sbr.rel (0) target = $region17
    $region16: #{_lambda_.1} parent=1 // pred_region
      _
    $region17: #{_lambda_.1} parent=1 // pred_fallthru
      _
    // Predicated region
    $region18: #{_lambda_.1} parent=1 // pred_check
      _
    $region19: #{_lambda_.1} parent=1 // pred_check_branch
      %34 = sbr.rel (0) target = $region21
    $region20: #{_lambda_.1} parent=1 // pred_region
      _
    $region21: #{_lambda_.1} parent=1 // pred_fallthru
      _
    // Predicated region
    $region22: #{_lambda_.1} parent=1 // pred_check
      _
    $region23: #{_lambda_.1} parent=1 // pred_check_branch
      %36 = sbr.rel (0) target = $region25
    $region24: #{_lambda_.1} parent=1 // pred_region
      _
    $region25: #{_lambda_.1} parent=1 // pred_fallthru
      _
    // Predicated region
    $region26: #{_lambda_.1} parent=1 // pred_check
      _
    $region27: #{_lambda_.1} parent=1 // pred_check_branch
      %38 = sbr.rel (0) target = $region29
    $region28: #{_lambda_.1} parent=1 // pred_region
      %39 = dma.done [#allocation4], 768
    $region29: #{_lambda_.1} parent=1 // pred_fallthru
      _
    %v41 = vld [vmem:[%s0] ss:$2 sm:$0x7f]
    %v42 = vpack.c.bf16 %v41, %v41
    %v43 = vld [vmem:[#allocation3] sm:$0xf]
    %v44 = vld [vmem:[#allocation3 + $0x4] sm:$0xf]
    %v45 = vld [vmem:[#allocation3 + $0x8] sm:$0xf]
    %v46 = vld [vmem:[#allocation3 + $0xc] sm:$0xf]
    %s47 = scalar_lea.vmem %s0, 1
    %v48 = vld [vmem:[%s47] ss:$2 sm:$0x7f]
    %v49 = vpack.c.bf16 %v48, %v48
    %s50 = scalar_lea.vmem [#allocation3], 16
    %v51 = vld [vmem:[%s50] sm:$0xf]
    %v52 = vld [vmem:[%s50 + $0x4] sm:$0xf]
    %v53 = vld [vmem:[%s50 + $0x8] sm:$0xf]
    %v54 = vld [vmem:[%s50 + $0xc] sm:$0xf]
    %v59 = vunpack.c.l.b16 %v51
    %v60 = vunpack.c.l.b16 %v52
    %v61 = vunpack.c.l.b16 %v53
    %v62 = vunpack.c.l.b16 %v54
    %v63 = vpack.c.b16 %v60, %v59
    %v64 = vpack.c.b16 %v62, %v61
    %vm67 = vcmask 261120
    %v69 = vsel %vm67, %v49, 0
    %71 = vmatprep.subr.bf16.mxu0 0
    %72 = vmatpush1.bf16.msra.mxu0 0
    %73 = vmatprep.subr.bf16.mxu0 0
    %74 = vmatpush1.bf16.msra.mxu0 0
    %75 = vmatprep.subr.bf16.mxu0 0
    %76 = vmatpush1.bf16.msra.mxu0 0
    %77 = vmatprep.subr.bf16.mxu0 0
    %78 = vmatpush1.bf16.msra.mxu0 0
    %79 = vmatprep.subr.bf16.mxu0 0
    %80 = vmatpush1.bf16.msra.mxu0 0
    %81 = vmatprep.subr.bf16.mxu0 0
    %82 = vmatpush1.bf16.msra.mxu0 0
    %83 = vmatprep.subr.bf16.mxu0 0
    %84 = vmatpush1.bf16.msra.mxu0 %v64
    %85 = vmatprep.subr.bf16.mxu0 0
    %86 = vmatpush1.bf16.msra.mxu0 %v63
    %87 = vmatprep.subr.bf16.mxu0 0
    %88 = vmatpush2.bf16.msra.mxu0 0
    %89 = vmatprep.subr.bf16.mxu0 0
    %90 = vmatpush2.bf16.msra.mxu0 0
    %91 = vmatprep.subr.bf16.mxu0 0
    %92 = vmatpush2.bf16.msra.mxu0 0
    %93 = vmatprep.subr.bf16.mxu0 0
    %94 = vmatpush2.bf16.msra.mxu0 0
    %95 = vmatprep.subr.bf16.mxu0 0
    %96 = vmatpush2.bf16.msra.mxu0 0
    %97 = vmatprep.subr.bf16.mxu0 0
    %98 = vmatpush2.bf16.msra.mxu0 0
    %99 = vmatprep.subr.bf16.mxu0 0
    %100 = vmatpush2.bf16.msra.mxu0 0
    %101 = vmatprep.subr.bf16.mxu0 0
    %102 = vmatpush2.bf16.msra.mxu0 0
    %103 = vmatprep.mubr.bf16.mxu0 0
    %104 = vmatmul.mubr.bf16.gmra.mxu0 %v69
    %v105 = vpop.f32.mrf.mxu0
    %v106 = vadd.f32 0.0, %v105
    %v107 = vpop.f32.mrf.mxu0
    %v108 = vpop.f32.mrf.mxu0
    %v109 = vpop.f32.mrf.mxu0
    %110 = vdwg.mxu0
    %v115 = vunpack.c.l.b16 %v43
    %v116 = vunpack.c.l.b16 %v44
    %v117 = vunpack.c.l.b16 %v45
    %v118 = vunpack.c.l.b16 %v46
    %v119 = vpack.c.b16 %v116, %v115
    %v120 = vpack.c.b16 %v118, %v117
    %v124 = vsel %vm67, %v42, 0
    %126 = vmatprep.subr.bf16.mxu0 0
    %127 = vmatpush1.bf16.msra.mxu0 0
    %128 = vmatprep.subr.bf16.mxu0 0
    %129 = vmatpush1.bf16.msra.mxu0 0
    %130 = vmatprep.subr.bf16.mxu0 0
    %131 = vmatpush1.bf16.msra.mxu0 0
    %132 = vmatprep.subr.bf16.mxu0 0
    %133 = vmatpush1.bf16.msra.mxu0 0
    %134 = vmatprep.subr.bf16.mxu0 0
    %135 = vmatpush1.bf16.msra.mxu0 0
    %136 = vmatprep.subr.bf16.mxu0 0
    %137 = vmatpush1.bf16.msra.mxu0 0
    %138 = vmatprep.subr.bf16.mxu0 0
    %139 = vmatpush1.bf16.msra.mxu0 %v120
    %140 = vmatprep.subr.bf16.mxu0 0
    %141 = vmatpush1.bf16.msra.mxu0 %v119
    %142 = vmatprep.subr.bf16.mxu0 0
    %143 = vmatpush2.bf16.msra.mxu0 0
    %144 = vmatprep.subr.bf16.mxu0 0
    %145 = vmatpush2.bf16.msra.mxu0 0
    %146 = vmatprep.subr.bf16.mxu0 0
    %147 = vmatpush2.bf16.msra.mxu0 0
    %148 = vmatprep.subr.bf16.mxu0 0
    %149 = vmatpush2.bf16.msra.mxu0 0
    %150 = vmatprep.subr.bf16.mxu0 0
    %151 = vmatpush2.bf16.msra.mxu0 0
    %152 = vmatprep.subr.bf16.mxu0 0
    %153 = vmatpush2.bf16.msra.mxu0 0
    %154 = vmatprep.subr.bf16.mxu0 0
    %155 = vmatpush2.bf16.msra.mxu0 0
    %156 = vmatprep.subr.bf16.mxu0 0
    %157 = vmatpush2.bf16.msra.mxu0 0
    %158 = vmatprep.mubr.bf16.mxu0 0
    %159 = vmatmul.mubr.bf16.gmra.mxu0 %v124
    %v160 = vpop.f32.mrf.mxu0
    %v161 = vadd.f32 %v106, %v160
    %v162 = vpop.f32.mrf.mxu0
    %v163 = vpop.f32.mrf.mxu0
    %v164 = vpop.f32.mrf.mxu0
    %165 = vdwg.mxu0
    %s166 = scalar_lea.vmem %s0, 2
    %v167 = vld [vmem:[%s166] ss:$2 sm:$0x7f]
    %v168 = vpack.c.bf16 %v167, %v167
    %s169 = scalar_lea.vmem [#allocation3], 32
    %v170 = vld [vmem:[%s169] sm:$0xf]
    %v171 = vld [vmem:[%s169 + $0x4] sm:$0xf]
    %v172 = vld [vmem:[%s169 + $0x8] sm:$0xf]
    %v173 = vld [vmem:[%s169 + $0xc] sm:$0xf]
    %v178 = vunpack.c.l.b16 %v170
    %v179 = vunpack.c.l.b16 %v171
    %v180 = vunpack.c.l.b16 %v172
    %v181 = vunpack.c.l.b16 %v173
    %v182 = vpack.c.b16 %v179, %v178
    %v183 = vpack.c.b16 %v181, %v180
    %v187 = vsel %vm67, %v168, 0
    %189 = vmatprep.subr.bf16.mxu0 0
    %190 = vmatpush1.bf16.msra.mxu0 0
    %191 = vmatprep.subr.bf16.mxu0 0
    %192 = vmatpush1.bf16.msra.mxu0 0
    %193 = vmatprep.subr.bf16.mxu0 0
    %194 = vmatpush1.bf16.msra.mxu0 0
    %195 = vmatprep.subr.bf16.mxu0 0
    %196 = vmatpush1.bf16.msra.mxu0 0
    %197 = vmatprep.subr.bf16.mxu0 0
    %198 = vmatpush1.bf16.msra.mxu0 0
    %199 = vmatprep.subr.bf16.mxu0 0
    %200 = vmatpush1.bf16.msra.mxu0 0
    %201 = vmatprep.subr.bf16.mxu0 0
    %202 = vmatpush1.bf16.msra.mxu0 %v183
    %203 = vmatprep.subr.bf16.mxu0 0
    %204 = vmatpush1.bf16.msra.mxu0 %v182
    %205 = vmatprep.subr.bf16.mxu0 0
    %206 = vmatpush2.bf16.msra.mxu0 0
    %207 = vmatprep.subr.bf16.mxu0 0
    %208 = vmatpush2.bf16.msra.mxu0 0
    %209 = vmatprep.subr.bf16.mxu0 0
    %210 = vmatpush2.bf16.msra.mxu0 0
    %211 = vmatprep.subr.bf16.mxu0 0
    %212 = vmatpush2.bf16.msra.mxu0 0
    %213 = vmatprep.subr.bf16.mxu0 0
    %214 = vmatpush2.bf16.msra.mxu0 0
    %215 = vmatprep.subr.bf16.mxu0 0
    %216 = vmatpush2.bf16.msra.mxu0 0
    %217 = vmatprep.subr.bf16.mxu0 0
    %218 = vmatpush2.bf16.msra.mxu0 0
    %219 = vmatprep.subr.bf16.mxu0 0
    %220 = vmatpush2.bf16.msra.mxu0 0
    %221 = vmatprep.mubr.bf16.mxu0 0
    %222 = vmatmul.mubr.bf16.gmra.mxu0 %v187
    %v223 = vpop.f32.mrf.mxu0
    %v224 = vadd.f32 0.0, %v223
    %v225 = vpop.f32.mrf.mxu0
    %v226 = vpop.f32.mrf.mxu0
    %v227 = vpop.f32.mrf.mxu0
    %228 = vdwg.mxu0
    %v229 = vadd.f32 %v161, %v224
    %v230 = vld [vmem:[%s2] sm:$0x1]
    %v232 = vlaneseq
    %v233 = vshrl.u32 %v232, 7
    %v234 = vsub.s32 0, %v233
    %v235 = vrot.slane %v230, %v234
    %v237 = vmul.f32 %v229, %v235
    %v238 = vld [vmem:[%s3] sm:$0x1]
    %v240 = vlaneseq
    %v241 = vshrl.u32 %v240, 7
    %v242 = vsub.s32 0, %v241
    %v243 = vrot.slane %v238, %v242
    %v245 = vadd.f32 %v237, %v243
    %v246 = vmax.f32 %v245, 0.0
    %vm247 = vcmask 257024
    %v248 = vsel %vm247, %v246, 0.0
    %v249 = vrot.slane %v248, 4
    %v250 = vadd.f32 %v248, %v249
    %v251 = vrot.slane %v250, 2
    %v252 = vadd.f32 %v250, %v251
    %v253 = vrot.slane %v252, 1
    %v254 = vadd.f32 %v252, %v253
    %v255 = vmul.f32 %v254, 0.25
    %v256 = vld [vmem:[%s4] sm:$0x1]
    %v257 = vmul.f32 %v255, %v256
    %vm258 = vcmask 253952
    %v259 = vsel %vm258, %v257, 0.0
    %260 = vadd.xlane.f32.xlu0 %v259
    %v261 = vpop.xlane.xlu0 %260
    %v262 = vld [vmem:[#allocation2] sm:$0x1]
    %v263 = vadd.f32 %v261, %v262
    %v264 = vxor.u32 %v263, 2147483648
    %v265 = vmul.f32 %v264, 1.442695
    %v266 = vpow.pop %v265
    %v267 = vadd.f32 %v266, 1.0
    %v268 = vrcp.pop %v267
    %v269 = vmul.f32 1.0, %v268
    %vm270 = vcmask 0
    %271 = vst.msk [vmem:[#allocation6] sm:$0x1] %vm270, %v269
    // Predicated region
    $region30: #{_lambda_.1} parent=1 // pred_check
      _
    $region31: #{_lambda_.1} parent=1 // pred_check_branch
      %273 = sbr.rel (0) target = $region33
    $region32: #{_lambda_.1} parent=1 // pred_region
      %s275 = ssub.s32 16, 16
      %276 = vsyncadd [#allocation5], %s275
      %s278 = sshll.u32 [#allocation6], 4
      %s279 = int_to_ptr.vmem [resolvable:$true] %s278
      %281 = dma.vmem_to_hbm [thread:$0]  %s279, 16, %s6, [#allocation5]
    $region33: #{_lambda_.1} parent=1 // pred_fallthru
      _
    // Predicated region
    $region34: #{_lambda_.1} parent=1 // pred_check
      _
    $region35: #{_lambda_.1} parent=1 // pred_check_branch
      %283 = sbr.rel (0) target = $region37
    $region36: #{_lambda_.1} parent=1 // pred_region
      %284 = dma.done [#allocation5], 16
    $region37: #{_lambda_.1} parent=1 // pred_fallthru
      _
    %285 = vsyncpa [#allocation4], 1
    %286 = vsyncpa [#allocation5], 1

// kernel: branch_1_fun.1
$region0: #{branch_1_fun.1}
  #allocation0 [shape = 'u32[]', space=smem, size = 0x4, offset = 0x4, fixed_abs, tag = 'smem constant byte address 0x4 - core index']
  #allocation1 [shape = 'u32[144,128]{1,0:T(1,128)}', space=vmem, size = 0x12000, scoped, tag = 'internal scratch']
  %s0 = inlined_call_operand.hbm [shape: f32[16,32], index: 0, kind: input, shape index: {}]
  %s1 = inlined_call_operand.hbm [shape: bf16[3,4,32,8], index: 1, kind: input, shape index: {}]
  %s2 = inlined_call_operand.hbm [shape: f32[3,4,1,8], index: 2, kind: input, shape index: {}]
  %s3 = inlined_call_operand.vmem [shape: bf16[4,8,32], index: 3, kind: input, shape index: {}]
  %s4 = inlined_call_operand.vmem [shape: f32[1,32], index: 4, kind: input, shape index: {}]
  %s5 = inlined_call_operand.vmem [shape: f32[1,32], index: 5, kind: input, shape index: {}, may-alias: {5,11}]
  %s6 = inlined_call_operand.vmem [shape: f32[1,32], index: 6, kind: input, shape index: {}, may-alias: {6,12}]
  %s7 = inlined_call_operand.hbm [shape: bf16[32,64], index: 7, kind: input, shape index: {}]
  %s8 = inlined_call_operand.vmem [shape: f32[1,64], index: 8, kind: input, shape index: {}]
  %s9 = inlined_call_operand.hbm [shape: bf16[64,32], index: 9, kind: input, shape index: {}]
  %s10 = inlined_call_operand.vmem [shape: f32[1,32], index: 10, kind: input, shape index: {}]
  %s11 = inlined_call_operand.vmem [shape: f32[1,32], index: 11, kind: input, shape index: {}, may-alias: {5,11}]
  %s12 = inlined_call_operand.vmem [shape: f32[1,32], index: 12, kind: input, shape index: {}, may-alias: {6,12}]
  %s13 = inlined_call_operand.vmem [shape: f32[16,32], index: 13, kind: output, shape index: {}]
  %s14 = sld [smem:[#allocation0]]
  $region82: #{branch_1_fun.1} parent=0
    _
  %s16 = ssub.s32 1, %s14
  %s17 = scalar_select 0, %s16, %s14
  $region1: #{branch_1_fun.1} parent=0
    #allocation2 [shape = 'u8[8192]{0}', space=vmem, size = 0x2000, scoped, tag = 'input window, operand 0, single buffered']
    #allocation3 [shape = 's32[1]{0}', space=sflag, size = 0x4, scoped, tag = 'scoped memory for branch_1_fun.1']
    #allocation4 [shape = 'u8[98304]{0}', space=vmem, size = 0x18000, scoped, tag = 'input window, operand 1, single buffered']
    #allocation5 [shape = 's32[1]{0}', space=sflag, size = 0x4, scoped, tag = 'scoped memory for branch_1_fun.1']
    #allocation6 [shape = 'u8[6144]{0}', space=vmem, size = 0x1800, scoped, tag = 'input window, operand 2, single buffered']
    #allocation7 [shape = 'u8[8192]{0}', space=vmem, size = 0x2000, scoped, tag = 'input window, operand 7, single buffered']
    #allocation8 [shape = 's32[1]{0}', space=sflag, size = 0x4, scoped, tag = 'scoped memory for branch_1_fun.1']
    #allocation9 [shape = 'u8[16384]{0}', space=vmem, size = 0x4000, scoped, tag = 'input window, operand 9, single buffered']
    %18 = vsyncpa [#allocation3], 0
    %19 = vsyncpa [#allocation5], 0
    %20 = vsyncpa [#allocation8], 0
    // Predicated region
    $region2: #{branch_1_fun.1} parent=1 // pred_check
      _
    $region3: #{branch_1_fun.1} parent=1 // pred_check_branch
      %22 = sbr.rel (0) target = $region5
    $region4: #{branch_1_fun.1} parent=1 // pred_region
      %s24 = ssub.s32 256, 256
      %25 = vsyncadd [#allocation3], %s24
      %s26 = sshll.u32 [#allocation2], 4
      %s27 = int_to_ptr.vmem [resolvable:$true] %s26
      %32 = dma.hbm_to_vmem [thread:$0]  %s0, 256, %s27, [#allocation3], 128, 128, 8
    $region5: #{branch_1_fun.1} parent=1 // pred_fallthru
      _
    // Predicated region
    $region6: #{branch_1_fun.1} parent=1 // pred_check
      _
    $region7: #{branch_1_fun.1} parent=1 // pred_check_branch
      %34 = sbr.rel (0) target = $region9
    $region8: #{branch_1_fun.1} parent=1 // pred_region
      %s36 = ssub.s32 3072, 3072
      %37 = vsyncadd [#allocation5], %s36
      %s38 = sshll.u32 [#allocation4], 4
      %s39 = int_to_ptr.vmem [resolvable:$true] %s38
      %44 = dma.hbm_to_vmem [thread:$0]  %s1, 3072, %s39, [#allocation5], 64, 64, 4
    $region9: #{branch_1_fun.1} parent=1 // pred_fallthru
      _
    // Predicated region
    $region10: #{branch_1_fun.1} parent=1 // pred_check
      _
    $region11: #{branch_1_fun.1} parent=1 // pred_check_branch
      %46 = sbr.rel (0) target = $region13
    $region12: #{branch_1_fun.1} parent=1 // pred_region
      %s48 = ssub.s32 192, 192
      %49 = vsyncadd [#allocation5], %s48
      %s50 = sshll.u32 [#allocation6], 4
      %s51 = int_to_ptr.vmem [resolvable:$true] %s50
      %56 = dma.hbm_to_vmem [thread:$0]  %s2, 192, %s51, [#allocation5], 16, 16, 1
    $region13: #{branch_1_fun.1} parent=1 // pred_fallthru
      _
    // Predicated region
    $region14: #{branch_1_fun.1} parent=1 // pred_check
      _
    $region15: #{branch_1_fun.1} parent=1 // pred_check_branch
      %58 = sbr.rel (0) target = $region17
    $region16: #{branch_1_fun.1} parent=1 // pred_region
      _
    $region17: #{branch_1_fun.1} parent=1 // pred_fallthru
      _
    // Predicated region
    $region18: #{branch_1_fun.1} parent=1 // pred_check
      _
    $region19: #{branch_1_fun.1} parent=1 // pred_check_branch
      %60 = sbr.rel (0) target = $region21
    $region20: #{branch_1_fun.1} parent=1 // pred_region
      _
    $region21: #{branch_1_fun.1} parent=1 // pred_fallthru
      _
    // Predicated region
    $region22: #{branch_1_fun.1} parent=1 // pred_check
      _
    $region23: #{branch_1_fun.1} parent=1 // pred_check_branch
      %62 = sbr.rel (0) target = $region25
    $region24: #{branch_1_fun.1} parent=1 // pred_region
      _
    $region25: #{branch_1_fun.1} parent=1 // pred_fallthru
      _
    // Predicated region
    $region26: #{branch_1_fun.1} parent=1 // pred_check
      _
    $region27: #{branch_1_fun.1} parent=1 // pred_check_branch
      %64 = sbr.rel (0) target = $region29
    $region28: #{branch_1_fun.1} parent=1 // pred_region
      _
    $region29: #{branch_1_fun.1} parent=1 // pred_fallthru
      _
    // Predicated region
    $region30: #{branch_1_fun.1} parent=1 // pred_check
      _
    $region31: #{branch_1_fun.1} parent=1 // pred_check_branch
      %66 = sbr.rel (0) target = $region33
    $region32: #{branch_1_fun.1} parent=1 // pred_region
      %s68 = ssub.s32 256, 256
      %69 = vsyncadd [#allocation8], %s68
      %s70 = sshll.u32 [#allocation7], 4
      %s71 = int_to_ptr.vmem [resolvable:$true] %s70
      %76 = dma.hbm_to_vmem [thread:$0]  %s7, 256, %s71, [#allocation8], 64, 64, 4
    $region33: #{branch_1_fun.1} parent=1 // pred_fallthru
      _
    // Predicated region
    $region34: #{branch_1_fun.1} parent=1 // pred_check
      _
    $region35: #{branch_1_fun.1} parent=1 // pred_check_branch
      %78 = sbr.rel (0) target = $region37
    $region36: #{branch_1_fun.1} parent=1 // pred_region
      _
    $region37: #{branch_1_fun.1} parent=1 // pred_fallthru
      _
    // Predicated region
    $region38: #{branch_1_fun.1} parent=1 // pred_check
      _
    $region39: #{branch_1_fun.1} parent=1 // pred_check_branch
      %80 = sbr.rel (0) target = $region41
    $region40: #{branch_1_fun.1} parent=1 // pred_region
      %s82 = ssub.s32 512, 512
      %83 = vsyncadd [#allocation8], %s82
      %s84 = sshll.u32 [#allocation9], 4
      %s85 = int_to_ptr.vmem [resolvable:$true] %s84
      %90 = dma.hbm_to_vmem [thread:$0]  %s9, 512, %s85, [#allocation8], 64, 64, 4
    $region41: #{branch_1_fun.1} parent=1 // pred_fallthru
      _
    // Predicated region
    $region42: #{branch_1_fun.1} parent=1 // pred_check
      _
    $region43: #{branch_1_fun.1} parent=1 // pred_check_branch
      %92 = sbr.rel (0) target = $region45
    $region44: #{branch_1_fun.1} parent=1 // pred_region
      _
    $region45: #{branch_1_fun.1} parent=1 // pred_fallthru
      _
    // Predicated region
    $region46: #{branch_1_fun.1} parent=1 // pred_check
      _
    $region47: #{branch_1_fun.1} parent=1 // pred_check_branch
      %94 = sbr.rel (0) target = $region49
    $region48: #{branch_1_fun.1} parent=1 // pred_region
      _
    $region49: #{branch_1_fun.1} parent=1 // pred_fallthru
      _
    // Predicated region
    $region50: #{branch_1_fun.1} parent=1 // pred_check
      _
    $region51: #{branch_1_fun.1} parent=1 // pred_check_branch
      %96 = sbr.rel (0) target = $region53
    $region52: #{branch_1_fun.1} parent=1 // pred_region
      _
    $region53: #{branch_1_fun.1} parent=1 // pred_fallthru
      _
    // Predicated region
    $region54: #{branch_1_fun.1} parent=1 // pred_check
      _
    $region55: #{branch_1_fun.1} parent=1 // pred_check_branch
      %98 = sbr.rel (0) target = $region57
    $region56: #{branch_1_fun.1} parent=1 // pred_region
      %99 = dma.done [#allocation3], 256
    $region57: #{branch_1_fun.1} parent=1 // pred_fallthru
      _
    // Predicated region
    $region58: #{branch_1_fun.1} parent=1 // pred_check
      _
    $region59: #{branch_1_fun.1} parent=1 // pred_check_branch
      %101 = sbr.rel (0) target = $region61
    $region60: #{branch_1_fun.1} parent=1 // pred_region
      %102 = dma.done [#allocation5], 3072
    $region61: #{branch_1_fun.1} parent=1 // pred_fallthru
      _
    // Predicated region
    $region62: #{branch_1_fun.1} parent=1 // pred_check
      _
    $region63: #{branch_1_fun.1} parent=1 // pred_check_branch
      %104 = sbr.rel (0) target = $region65
    $region64: #{branch_1_fun.1} parent=1 // pred_region
      %105 = dma.done [#allocation5], 192
    $region65: #{branch_1_fun.1} parent=1 // pred_fallthru
      _
    // Predicated region
    $region66: #{branch_1_fun.1} parent=1 // pred_check
      _
    $region67: #{branch_1_fun.1} parent=1 // pred_check_branch
      %107 = sbr.rel (0) target = $region69
    $region68: #{branch_1_fun.1} parent=1 // pred_region
      %108 = dma.done [#allocation8], 256
    $region69: #{branch_1_fun.1} parent=1 // pred_fallthru
      _
    // Predicated region
    $region70: #{branch_1_fun.1} parent=1 // pred_check
      _
    $region71: #{branch_1_fun.1} parent=1 // pred_check_branch
      %110 = sbr.rel (0) target = $region73
    $region72: #{branch_1_fun.1} parent=1 // pred_region
      %111 = dma.done [#allocation8], 512
    $region73: #{branch_1_fun.1} parent=1 // pred_fallthru
      _
    %v113 = vld [vmem:[#allocation2] sm:$0xff]
    %v114 = vld [vmem:[#allocation2 + $0x8] sm:$0xff]
    %v115 = vpack.c.bf16 %v114, %v113
    %v116 = vld [vmem:[#allocation4] sm:$0xf]
    %v117 = vld [vmem:[#allocation4 + $0x4] sm:$0xf]
    %v118 = vld [vmem:[#allocation4 + $0x8] sm:$0xf]
    %v119 = vld [vmem:[#allocation4 + $0xc] sm:$0xf]
    %v120 = vld [vmem:[#allocation6] sm:$0x1]
    %v122 = vlaneseq
    %v123 = vshrl.u32 %v122, 7
    %v124 = vsub.s32 0, %v123
    %v125 = vrot.slane %v120, %v124
    %v131 = vunpack.c.l.b16 %v116
    %v132 = vunpack.c.l.b16 %v117
    %v133 = vunpack.c.l.b16 %v118
    %v134 = vunpack.c.l.b16 %v119
    %v135 = vpack.c.b16 %v132, %v131
    %v136 = vpack.c.b16 %v134, %v133
    %vm139 = vcmask 261120
    %v141 = vsel %vm139, %v115, 0
    %143 = vmatprep.subr.bf16.mxu0 0
    %144 = vmatpush1.bf16.msra.mxu0 0
    %145 = vmatprep.subr.bf16.mxu0 0
    %146 = vmatpush1.bf16.msra.mxu0 0
    %147 = vmatprep.subr.bf16.mxu0 0
    %148 = vmatpush1.bf16.msra.mxu0 0
    %149 = vmatprep.subr.bf16.mxu0 0
    %150 = vmatpush1.bf16.msra.mxu0 0
    %151 = vmatprep.subr.bf16.mxu0 0
    %152 = vmatpush1.bf16.msra.mxu0 0
    %153 = vmatprep.subr.bf16.mxu0 0
    %154 = vmatpush1.bf16.msra.mxu0 0
    %155 = vmatprep.subr.bf16.mxu0 0
    %156 = vmatpush1.bf16.msra.mxu0 %v136
    %157 = vmatprep.subr.bf16.mxu0 0
    %158 = vmatpush1.bf16.msra.mxu0 %v135
    %159 = vmatprep.subr.bf16.mxu0 0
    %160 = vmatpush2.bf16.msra.mxu0 0
    %161 = vmatprep.subr.bf16.mxu0 0
    %162 = vmatpush2.bf16.msra.mxu0 0
    %163 = vmatprep.subr.bf16.mxu0 0
    %164 = vmatpush2.bf16.msra.mxu0 0
    %165 = vmatprep.subr.bf16.mxu0 0
    %166 = vmatpush2.bf16.msra.mxu0 0
    %167 = vmatprep.subr.bf16.mxu0 0
    %168 = vmatpush2.bf16.msra.mxu0 0
    %169 = vmatprep.subr.bf16.mxu0 0
    %170 = vmatpush2.bf16.msra.mxu0 0
    %171 = vmatprep.subr.bf16.mxu0 0
    %172 = vmatpush2.bf16.msra.mxu0 0
    %173 = vmatprep.subr.bf16.mxu0 0
    %174 = vmatpush2.bf16.msra.mxu0 0
    %175 = vmatprep.mubr.bf16.mxu0 0
    %176 = vmatmul.mubr.bf16.gmra.mxu0 %v141
    %v177 = vpop.f32.mrf.mxu0
    %v178 = vadd.f32 %v125, %v177
    %v179 = vpop.f32.mrf.mxu0
    %v180 = vpop.f32.mrf.mxu0
    %v181 = vadd.f32 %v125, %v180
    %v182 = vpop.f32.mrf.mxu0
    %183 = vdwg.mxu0
    %s184 = scalar_lea.vmem [#allocation4], 64
    %v185 = vld [vmem:[%s184] sm:$0xf]
    %v186 = vld [vmem:[%s184 + $0x4] sm:$0xf]
    %v187 = vld [vmem:[%s184 + $0x8] sm:$0xf]
    %v188 = vld [vmem:[%s184 + $0xc] sm:$0xf]
    %s189 = scalar_lea.vmem [#allocation6], 4
    %v190 = vld [vmem:[%s189] sm:$0x1]
    %v192 = vlaneseq
    %v193 = vshrl.u32 %v192, 7
    %v194 = vsub.s32 0, %v193
    %v195 = vrot.slane %v190, %v194
    %v201 = vunpack.c.l.b16 %v185
    %v202 = vunpack.c.l.b16 %v186
    %v203 = vunpack.c.l.b16 %v187
    %v204 = vunpack.c.l.b16 %v188
    %v205 = vpack.c.b16 %v202, %v201
    %v206 = vpack.c.b16 %v204, %v203
    %209 = vmatprep.subr.bf16.mxu0 0
    %210 = vmatpush1.bf16.msra.mxu0 0
    %211 = vmatprep.subr.bf16.mxu0 0
    %212 = vmatpush1.bf16.msra.mxu0 0
    %213 = vmatprep.subr.bf16.mxu0 0
    %214 = vmatpush1.bf16.msra.mxu0 0
    %215 = vmatprep.subr.bf16.mxu0 0
    %216 = vmatpush1.bf16.msra.mxu0 0
    %217 = vmatprep.subr.bf16.mxu0 0
    %218 = vmatpush1.bf16.msra.mxu0 0
    %219 = vmatprep.subr.bf16.mxu0 0
    %220 = vmatpush1.bf16.msra.mxu0 0
    %221 = vmatprep.subr.bf16.mxu0 0
    %222 = vmatpush1.bf16.msra.mxu0 %v206
    %223 = vmatprep.subr.bf16.mxu0 0
    %224 = vmatpush1.bf16.msra.mxu0 %v205
    %225 = vmatprep.subr.bf16.mxu0 0
    %226 = vmatpush2.bf16.msra.mxu0 0
    %227 = vmatprep.subr.bf16.mxu0 0
    %228 = vmatpush2.bf16.msra.mxu0 0
    %229 = vmatprep.subr.bf16.mxu0 0
    %230 = vmatpush2.bf16.msra.mxu0 0
    %231 = vmatprep.subr.bf16.mxu0 0
    %232 = vmatpush2.bf16.msra.mxu0 0
    %233 = vmatprep.subr.bf16.mxu0 0
    %234 = vmatpush2.bf16.msra.mxu0 0
    %235 = vmatprep.subr.bf16.mxu0 0
    %236 = vmatpush2.bf16.msra.mxu0 0
    %237 = vmatprep.subr.bf16.mxu0 0
    %238 = vmatpush2.bf16.msra.mxu0 0
    %239 = vmatprep.subr.bf16.mxu0 0
    %240 = vmatpush2.bf16.msra.mxu0 0
    %241 = vmatprep.mubr.bf16.mxu0 0
    %242 = vmatmul.mubr.bf16.gmra.mxu0 %v141
    %v243 = vpop.f32.mrf.mxu0
    %v244 = vadd.f32 %v195, %v243
    %v245 = vpop.f32.mrf.mxu0
    %v246 = vpop.f32.mrf.mxu0
    %v247 = vadd.f32 %v195, %v246
    %v248 = vpop.f32.mrf.mxu0
    %249 = vdwg.mxu0
    %s250 = scalar_lea.vmem [#allocation4], 128
    %v251 = vld [vmem:[%s250] sm:$0xf]
    %v252 = vld [vmem:[%s250 + $0x4] sm:$0xf]
    %v253 = vld [vmem:[%s250 + $0x8] sm:$0xf]
    %v254 = vld [vmem:[%s250 + $0xc] sm:$0xf]
    %s255 = scalar_lea.vmem [#allocation6], 8
    %v256 = vld [vmem:[%s255] sm:$0x1]
    %v258 = vlaneseq
    %v259 = vshrl.u32 %v258, 7
    %v260 = vsub.s32 0, %v259
    %v261 = vrot.slane %v256, %v260
    %v267 = vunpack.c.l.b16 %v251
    %v268 = vunpack.c.l.b16 %v252
    %v269 = vunpack.c.l.b16 %v253
    %v270 = vunpack.c.l.b16 %v254
    %v271 = vpack.c.b16 %v268, %v267
    %v272 = vpack.c.b16 %v270, %v269
    %275 = vmatprep.subr.bf16.mxu0 0
    %276 = vmatpush1.bf16.msra.mxu0 0
    %277 = vmatprep.subr.bf16.mxu0 0
    %278 = vmatpush1.bf16.msra.mxu0 0
    %279 = vmatprep.subr.bf16.mxu0 0
    %280 = vmatpush1.bf16.msra.mxu0 0
    %281 = vmatprep.subr.bf16.mxu0 0
    %282 = vmatpush1.bf16.msra.mxu0 0
    %283 = vmatprep.subr.bf16.mxu0 0
    %284 = vmatpush1.bf16.msra.mxu0 0
    %285 = vmatprep.subr.bf16.mxu0 0
    %286 = vmatpush1.bf16.msra.mxu0 0
    %287 = vmatprep.subr.bf16.mxu0 0
    %288 = vmatpush1.bf16.msra.mxu0 %v272
    %289 = vmatprep.subr.bf16.mxu0 0
    %290 = vmatpush1.bf16.msra.mxu0 %v271
    %291 = vmatprep.subr.bf16.mxu0 0
    %292 = vmatpush2.bf16.msra.mxu0 0
    %293 = vmatprep.subr.bf16.mxu0 0
    %294 = vmatpush2.bf16.msra.mxu0 0
    %295 = vmatprep.subr.bf16.mxu0 0
    %296 = vmatpush2.bf16.msra.mxu0 0
    %297 = vmatprep.subr.bf16.mxu0 0
    %298 = vmatpush2.bf16.msra.mxu0 0
    %299 = vmatprep.subr.bf16.mxu0 0
    %300 = vmatpush2.bf16.msra.mxu0 0
    %301 = vmatprep.subr.bf16.mxu0 0
    %302 = vmatpush2.bf16.msra.mxu0 0
    %303 = vmatprep.subr.bf16.mxu0 0
    %304 = vmatpush2.bf16.msra.mxu0 0
    %305 = vmatprep.subr.bf16.mxu0 0
    %306 = vmatpush2.bf16.msra.mxu0 0
    %307 = vmatprep.mubr.bf16.mxu0 0
    %308 = vmatmul.mubr.bf16.gmra.mxu0 %v141
    %v309 = vpop.f32.mrf.mxu0
    %v310 = vadd.f32 %v261, %v309
    %v311 = vpop.f32.mrf.mxu0
    %v312 = vpop.f32.mrf.mxu0
    %v313 = vadd.f32 %v261, %v312
    %v314 = vpop.f32.mrf.mxu0
    %315 = vdwg.mxu0
    %v316 = vpack.c.bf16 %v181, %v178
    %v317 = vpack.c.bf16 %v247, %v244
    %vm318 = vcmask 64512
    %v320 = vsel %vm318, %v316, 0
    %v323 = vsel %vm318, %v317, 0
    %325 = vmatprep.subr.bf16.mxu0 0
    %326 = vmatpush1.bf16.xpose.msra.mxu0 0
    %327 = vmatprep.subr.bf16.mxu0 0
    %328 = vmatpush1.bf16.xpose.msra.mxu0 0
    %329 = vmatprep.subr.bf16.mxu0 0
    %330 = vmatpush1.bf16.xpose.msra.mxu0 0
    %331 = vmatprep.subr.bf16.mxu0 0
    %332 = vmatpush1.bf16.xpose.msra.mxu0 0
    %333 = vmatprep.subr.bf16.mxu0 0
    %334 = vmatpush1.bf16.xpose.msra.mxu0 0
    %335 = vmatprep.subr.bf16.mxu0 0
    %336 = vmatpush1.bf16.xpose.msra.mxu0 0
    %337 = vmatprep.subr.bf16.mxu0 0
    %338 = vmatpush1.bf16.xpose.msra.mxu0 0
    %339 = vmatprep.subr.bf16.mxu0 0
    %340 = vmatpush1.bf16.xpose.msra.mxu0 %v323
    %341 = vmatprep.subr.bf16.mxu0 0
    %342 = vmatpush2.bf16.xpose.msra.mxu0 0
    %343 = vmatprep.subr.bf16.mxu0 0
    %344 = vmatpush2.bf16.xpose.msra.mxu0 0
    %345 = vmatprep.subr.bf16.mxu0 0
    %346 = vmatpush2.bf16.xpose.msra.mxu0 0
    %347 = vmatprep.subr.bf16.mxu0 0
    %348 = vmatpush2.bf16.xpose.msra.mxu0 0
    %349 = vmatprep.subr.bf16.mxu0 0
    %350 = vmatpush2.bf16.xpose.msra.mxu0 0
    %351 = vmatprep.subr.bf16.mxu0 0
    %352 = vmatpush2.bf16.xpose.msra.mxu0 0
    %353 = vmatprep.subr.bf16.mxu0 0
    %354 = vmatpush2.bf16.xpose.msra.mxu0 0
    %355 = vmatprep.subr.bf16.mxu0 0
    %356 = vmatpush2.bf16.xpose.msra.mxu0 0
    %357 = vmatprep.mubr.bf16.mxu0 0
    %358 = vmatmul.mubr.bf16.gmra.mxu0 %v320
    %v359 = vpop.f32.mrf.mxu0
    %v360 = vadd.f32 0.0, %v359
    %v361 = vpop.f32.mrf.mxu0
    %v362 = vpop.f32.mrf.mxu0
    %v363 = vadd.f32 0.0, %v362
    %v364 = vpop.f32.mrf.mxu0
    %365 = vdwg.mxu0
    %v366 = vmul.f32 %v360, 0.35355338
    %v367 = vmul.f32 %v363, 0.35355338
    %vm368 = vcmask 130048
    %v369 = vsel %vm368, %v366, -inf
    %370 = vmax.xlane.f32.xlu0 %v369
    %v371 = vpop.xlane.xlu0 %370
    %v372 = vsel %vm368, %v367, -inf
    %373 = vmax.xlane.f32.xlu0 %v372
    %v374 = vpop.xlane.xlu0 %373
    %v375 = vsub.f32 %v366, %v371
    %v376 = vsub.f32 %v367, %v374
    %v377 = vmul.f32 %v375, 1.442695
    %v378 = vpow.pop %v377
    %v379 = vmul.f32 %v376, 1.442695
    %v380 = vpow.pop %v379
    %v381 = vsel %vm368, %v378, 0.0
    %382 = vadd.xlane.f32.xlu0 %v381
    %v383 = vpop.xlane.xlu0 %382
    %v384 = vsel %vm368, %v380, 0.0
    %385 = vadd.xlane.f32.xlu0 %v384
    %v386 = vpop.xlane.xlu0 %385
    %v387 = vrcp.pop %v383
    %v388 = vrcp.pop %v386
    %v389 = vmul.f32 %v378, %v387
    %v390 = vmul.f32 %v380, %v388
    %v391 = vpack.c.bf16 %v390, %v389
    %v392 = vpack.c.bf16 %v313, %v310
    %v394 = vsel %vm368, %v391, 0
    %396 = vmatprep.subr.bf16.mxu0 0
    %397 = vmatpush1.bf16.msra.mxu0 0
    %398 = vmatprep.subr.bf16.mxu0 0
    %399 = vmatpush1.bf16.msra.mxu0 0
    %400 = vmatprep.subr.bf16.mxu0 0
    %401 = vmatpush1.bf16.msra.mxu0 0
    %402 = vmatprep.subr.bf16.mxu0 0
    %403 = vmatpush1.bf16.msra.mxu0 0
    %404 = vmatprep.subr.bf16.mxu0 0
    %405 = vmatpush1.bf16.msra.mxu0 0
    %406 = vmatprep.subr.bf16.mxu0 0
    %407 = vmatpush1.bf16.msra.mxu0 0
    %408 = vmatprep.subr.bf16.mxu0 0
    %409 = vmatpush1.bf16.msra.mxu0 0
    %410 = vmatprep.subr.bf16.mxu0 0
    %411 = vmatpush1.bf16.msra.mxu0 %v392
    %412 = vmatprep.subr.bf16.mxu0 0
    %413 = vmatpush2.bf16.msra.mxu0 0
    %414 = vmatprep.subr.bf16.mxu0 0
    %415 = vmatpush2.bf16.msra.mxu0 0
    %416 = vmatprep.subr.bf16.mxu0 0
    %417 = vmatpush2.bf16.msra.mxu0 0
    %418 = vmatprep.subr.bf16.mxu0 0
    %419 = vmatpush2.bf16.msra.mxu0 0
    %420 = vmatprep.subr.bf16.mxu0 0
    %421 = vmatpush2.bf16.msra.mxu0 0
    %422 = vmatprep.subr.bf16.mxu0 0
    %423 = vmatpush2.bf16.msra.mxu0 0
    %424 = vmatprep.subr.bf16.mxu0 0
    %425 = vmatpush2.bf16.msra.mxu0 0
    %426 = vmatprep.subr.bf16.mxu0 0
    %427 = vmatpush2.bf16.msra.mxu0 0
    %428 = vmatprep.mubr.bf16.mxu0 0
    %429 = vmatmul.mubr.bf16.gmra.mxu0 %v394
    %v430 = vpop.f32.mrf.mxu0
    %v431 = vadd.f32 0.0, %v430
    %v432 = vpop.f32.mrf.mxu0
    %v433 = vpop.f32.mrf.mxu0
    %v434 = vadd.f32 0.0, %v433
    %v435 = vpop.f32.mrf.mxu0
    %436 = vdwg.mxu0
    %v437 = vpack.c.bf16 %v434, %v431
    %v438 = vld [vmem:[%s3] sm:$0xf]
    %s439 = scalar_lea.vmem [#allocation4], 16
    %v440 = vld [vmem:[%s439] sm:$0xf]
    %v441 = vld [vmem:[%s439 + $0x4] sm:$0xf]
    %v442 = vld [vmem:[%s439 + $0x8] sm:$0xf]
    %v443 = vld [vmem:[%s439 + $0xc] sm:$0xf]
    %s444 = scalar_lea.vmem [#allocation6], 1
    %v445 = vld [vmem:[%s444] sm:$0x1]
    %v447 = vlaneseq
    %v448 = vshrl.u32 %v447, 7
    %v449 = vsub.s32 0, %v448
    %v450 = vrot.slane %v445, %v449
    %v456 = vunpack.c.l.b16 %v440
    %v457 = vunpack.c.l.b16 %v441
    %v458 = vunpack.c.l.b16 %v442
    %v459 = vunpack.c.l.b16 %v443
    %v460 = vpack.c.b16 %v457, %v456
    %v461 = vpack.c.b16 %v459, %v458
    %464 = vmatprep.subr.bf16.mxu0 0
    %465 = vmatpush1.bf16.msra.mxu0 0
    %466 = vmatprep.subr.bf16.mxu0 0
    %467 = vmatpush1.bf16.msra.mxu0 0
    %468 = vmatprep.subr.bf16.mxu0 0
    %469 = vmatpush1.bf16.msra.mxu0 0
    %470 = vmatprep.subr.bf16.mxu0 0
    %471 = vmatpush1.bf16.msra.mxu0 0
    %472 = vmatprep.subr.bf16.mxu0 0
    %473 = vmatpush1.bf16.msra.mxu0 0
    %474 = vmatprep.subr.bf16.mxu0 0
    %475 = vmatpush1.bf16.msra.mxu0 0
    %476 = vmatprep.subr.bf16.mxu0 0
    %477 = vmatpush1.bf16.msra.mxu0 %v461
    %478 = vmatprep.subr.bf16.mxu0 0
    %479 = vmatpush1.bf16.msra.mxu0 %v460
    %480 = vmatprep.subr.bf16.mxu0 0
    %481 = vmatpush2.bf16.msra.mxu0 0
    %482 = vmatprep.subr.bf16.mxu0 0
    %483 = vmatpush2.bf16.msra.mxu0 0
    %484 = vmatprep.subr.bf16.mxu0 0
    %485 = vmatpush2.bf16.msra.mxu0 0
    %486 = vmatprep.subr.bf16.mxu0 0
    %487 = vmatpush2.bf16.msra.mxu0 0
    %488 = vmatprep.subr.bf16.mxu0 0
    %489 = vmatpush2.bf16.msra.mxu0 0
    %490 = vmatprep.subr.bf16.mxu0 0
    %491 = vmatpush2.bf16.msra.mxu0 0
    %492 = vmatprep.subr.bf16.mxu0 0
    %493 = vmatpush2.bf16.msra.mxu0 0
    %494 = vmatprep.subr.bf16.mxu0 0
    %495 = vmatpush2.bf16.msra.mxu0 0
    %496 = vmatprep.mubr.bf16.mxu0 0
    %497 = vmatmul.mubr.bf16.gmra.mxu0 %v141
    %v498 = vpop.f32.mrf.mxu0
    %v499 = vadd.f32 %v450, %v498
    %v500 = vpop.f32.mrf.mxu0
    %v501 = vpop.f32.mrf.mxu0
    %v502 = vadd.f32 %v450, %v501
    %v503 = vpop.f32.mrf.mxu0
    %504 = vdwg.mxu0
    %s505 = scalar_lea.vmem [#allocation4], 80
    %v506 = vld [vmem:[%s505] sm:$0xf]
    %v507 = vld [vmem:[%s505 + $0x4] sm:$0xf]
    %v508 = vld [vmem:[%s505 + $0x8] sm:$0xf]
    %v509 = vld [vmem:[%s505 + $0xc] sm:$0xf]
    %s510 = scalar_lea.vmem [#allocation6], 5
    %v511 = vld [vmem:[%s510] sm:$0x1]
    %v513 = vlaneseq
    %v514 = vshrl.u32 %v513, 7
    %v515 = vsub.s32 0, %v514
    %v516 = vrot.slane %v511, %v515
    %v522 = vunpack.c.l.b16 %v506
    %v523 = vunpack.c.l.b16 %v507
    %v524 = vunpack.c.l.b16 %v508
    %v525 = vunpack.c.l.b16 %v509
    %v526 = vpack.c.b16 %v523, %v522
    %v527 = vpack.c.b16 %v525, %v524
    %530 = vmatprep.subr.bf16.mxu0 0
    %531 = vmatpush1.bf16.msra.mxu0 0
    %532 = vmatprep.subr.bf16.mxu0 0
    %533 = vmatpush1.bf16.msra.mxu0 0
    %534 = vmatprep.subr.bf16.mxu0 0
    %535 = vmatpush1.bf16.msra.mxu0 0
    %536 = vmatprep.subr.bf16.mxu0 0
    %537 = vmatpush1.bf16.msra.mxu0 0
    %538 = vmatprep.subr.bf16.mxu0 0
    %539 = vmatpush1.bf16.msra.mxu0 0
    %540 = vmatprep.subr.bf16.mxu0 0
    %541 = vmatpush1.bf16.msra.mxu0 0
    %542 = vmatprep.subr.bf16.mxu0 0
    %543 = vmatpush1.bf16.msra.mxu0 %v527
    %544 = vmatprep.subr.bf16.mxu0 0
    %545 = vmatpush1.bf16.msra.mxu0 %v526
    %546 = vmatprep.subr.bf16.mxu0 0
    %547 = vmatpush2.bf16.msra.mxu0 0
    %548 = vmatprep.subr.bf16.mxu0 0
    %549 = vmatpush2.bf16.msra.mxu0 0
    %550 = vmatprep.subr.bf16.mxu0 0
    %551 = vmatpush2.bf16.msra.mxu0 0
    %552 = vmatprep.subr.bf16.mxu0 0
    %553 = vmatpush2.bf16.msra.mxu0 0
    %554 = vmatprep.subr.bf16.mxu0 0
    %555 = vmatpush2.bf16.msra.mxu0 0
    %556 = vmatprep.subr.bf16.mxu0 0
    %557 = vmatpush2.bf16.msra.mxu0 0
    %558 = vmatprep.subr.bf16.mxu0 0
    %559 = vmatpush2.bf16.msra.mxu0 0
    %560 = vmatprep.subr.bf16.mxu0 0
    %561 = vmatpush2.bf16.msra.mxu0 0
    %562 = vmatprep.mubr.bf16.mxu0 0
    %563 = vmatmul.mubr.bf16.gmra.mxu0 %v141
    %v564 = vpop.f32.mrf.mxu0
    %v565 = vadd.f32 %v516, %v564
    %v566 = vpop.f32.mrf.mxu0
    %v567 = vpop.f32.mrf.mxu0
    %v568 = vadd.f32 %v516, %v567
    %v569 = vpop.f32.mrf.mxu0
    %570 = vdwg.mxu0
    %s571 = scalar_lea.vmem [#allocation4], 144
    %v572 = vld [vmem:[%s571] sm:$0xf]
    %v573 = vld [vmem:[%s571 + $0x4] sm:$0xf]
    %v574 = vld [vmem:[%s571 + $0x8] sm:$0xf]
    %v575 = vld [vmem:[%s571 + $0xc] sm:$0xf]
    %s576 = scalar_lea.vmem [#allocation6], 9
    %v577 = vld [vmem:[%s576] sm:$0x1]
    %v579 = vlaneseq
    %v580 = vshrl.u32 %v579, 7
    %v581 = vsub.s32 0, %v580
    %v582 = vrot.slane %v577, %v581
    %v588 = vunpack.c.l.b16 %v572
    %v589 = vunpack.c.l.b16 %v573
    %v590 = vunpack.c.l.b16 %v574
    %v591 = vunpack.c.l.b16 %v575
    %v592 = vpack.c.b16 %v589, %v588
    %v593 = vpack.c.b16 %v591, %v590
    %596 = vmatprep.subr.bf16.mxu0 0
    %597 = vmatpush1.bf16.msra.mxu0 0
    %598 = vmatprep.subr.bf16.mxu0 0
    %599 = vmatpush1.bf16.msra.mxu0 0
    %600 = vmatprep.subr.bf16.mxu0 0
    %601 = vmatpush1.bf16.msra.mxu0 0
    %602 = vmatprep.subr.bf16.mxu0 0
    %603 = vmatpush1.bf16.msra.mxu0 0
    %604 = vmatprep.subr.bf16.mxu0 0
    %605 = vmatpush1.bf16.msra.mxu0 0
    %606 = vmatprep.subr.bf16.mxu0 0
    %607 = vmatpush1.bf16.msra.mxu0 0
    %608 = vmatprep.subr.bf16.mxu0 0
    %609 = vmatpush1.bf16.msra.mxu0 %v593
    %610 = vmatprep.subr.bf16.mxu0 0
    %611 = vmatpush1.bf16.msra.mxu0 %v592
    %612 = vmatprep.subr.bf16.mxu0 0
    %613 = vmatpush2.bf16.msra.mxu0 0
    %614 = vmatprep.subr.bf16.mxu0 0
    %615 = vmatpush2.bf16.msra.mxu0 0
    %616 = vmatprep.subr.bf16.mxu0 0
    %617 = vmatpush2.bf16.msra.mxu0 0
    %618 = vmatprep.subr.bf16.mxu0 0
    %619 = vmatpush2.bf16.msra.mxu0 0
    %620 = vmatprep.subr.bf16.mxu0 0
    %621 = vmatpush2.bf16.msra.mxu0 0
    %622 = vmatprep.subr.bf16.mxu0 0
    %623 = vmatpush2.bf16.msra.mxu0 0
    %624 = vmatprep.subr.bf16.mxu0 0
    %625 = vmatpush2.bf16.msra.mxu0 0
    %626 = vmatprep.subr.bf16.mxu0 0
    %627 = vmatpush2.bf16.msra.mxu0 0
    %628 = vmatprep.mubr.bf16.mxu0 0
    %629 = vmatmul.mubr.bf16.gmra.mxu0 %v141
    %v630 = vpop.f32.mrf.mxu0
    %v631 = vadd.f32 %v582, %v630
    %v632 = vpop.f32.mrf.mxu0
    %v633 = vpop.f32.mrf.mxu0
    %v634 = vadd.f32 %v582, %v633
    %v635 = vpop.f32.mrf.mxu0
    %636 = vdwg.mxu0
    %v637 = vpack.c.bf16 %v502, %v499
    %v638 = vpack.c.bf16 %v568, %v565
    %v640 = vsel %vm318, %v637, 0
    %v643 = vsel %vm318, %v638, 0
    %645 = vmatprep.subr.bf16.mxu0 0
    %646 = vmatpush1.bf16.xpose.msra.mxu0 0
    %647 = vmatprep.subr.bf16.mxu0 0
    %648 = vmatpush1.bf16.xpose.msra.mxu0 0
    %649 = vmatprep.subr.bf16.mxu0 0
    %650 = vmatpush1.bf16.xpose.msra.mxu0 0
    %651 = vmatprep.subr.bf16.mxu0 0
    %652 = vmatpush1.bf16.xpose.msra.mxu0 0
    %653 = vmatprep.subr.bf16.mxu0 0
    %654 = vmatpush1.bf16.xpose.msra.mxu0 0
    %655 = vmatprep.subr.bf16.mxu0 0
    %656 = vmatpush1.bf16.xpose.msra.mxu0 0
    %657 = vmatprep.subr.bf16.mxu0 0
    %658 = vmatpush1.bf16.xpose.msra.mxu0 0
    %659 = vmatprep.subr.bf16.mxu0 0
    %660 = vmatpush1.bf16.xpose.msra.mxu0 %v643
    %661 = vmatprep.subr.bf16.mxu0 0
    %662 = vmatpush2.bf16.xpose.msra.mxu0 0
    %663 = vmatprep.subr.bf16.mxu0 0
    %664 = vmatpush2.bf16.xpose.msra.mxu0 0
    %665 = vmatprep.subr.bf16.mxu0 0
    %666 = vmatpush2.bf16.xpose.msra.mxu0 0
    %667 = vmatprep.subr.bf16.mxu0 0
    %668 = vmatpush2.bf16.xpose.msra.mxu0 0
    %669 = vmatprep.subr.bf16.mxu0 0
    %670 = vmatpush2.bf16.xpose.msra.mxu0 0
    %671 = vmatprep.subr.bf16.mxu0 0
    %672 = vmatpush2.bf16.xpose.msra.mxu0 0
    %673 = vmatprep.subr.bf16.mxu0 0
    %674 = vmatpush2.bf16.xpose.msra.mxu0 0
    %675 = vmatprep.subr.bf16.mxu0 0
    %676 = vmatpush2.bf16.xpose.msra.mxu0 0
    %677 = vmatprep.mubr.bf16.mxu0 0
    %678 = vmatmul.mubr.bf16.gmra.mxu0 %v640
    %v679 = vpop.f32.mrf.mxu0
    %v680 = vadd.f32 0.0, %v679
    %v681 = vpop.f32.mrf.mxu0
    %v682 = vpop.f32.mrf.mxu0
    %v683 = vadd.f32 0.0, %v682
    %v684 = vpop.f32.mrf.mxu0
    %685 = vdwg.mxu0
    %v686 = vmul.f32 %v680, 0.35355338
    %v687 = vmul.f32 %v683, 0.35355338
    %v688 = vsel %vm368, %v686, -inf
    %689 = vmax.xlane.f32.xlu0 %v688
    %v690 = vpop.xlane.xlu0 %689
    %v691 = vsel %vm368, %v687, -inf
    %692 = vmax.xlane.f32.xlu0 %v691
    %v693 = vpop.xlane.xlu0 %692
    %v694 = vsub.f32 %v686, %v690
    %v695 = vsub.f32 %v687, %v693
    %v696 = vmul.f32 %v694, 1.442695
    %v697 = vpow.pop %v696
    %v698 = vmul.f32 %v695, 1.442695
    %v699 = vpow.pop %v698
    %v700 = vsel %vm368, %v697, 0.0
    %701 = vadd.xlane.f32.xlu0 %v700
    %v702 = vpop.xlane.xlu0 %701
    %v703 = vsel %vm368, %v699, 0.0
    %704 = vadd.xlane.f32.xlu0 %v703
    %v705 = vpop.xlane.xlu0 %704
    %v706 = vrcp.pop %v702
    %v707 = vrcp.pop %v705
    %v708 = vmul.f32 %v697, %v706
    %v709 = vmul.f32 %v699, %v707
    %v710 = vpack.c.bf16 %v709, %v708
    %v711 = vpack.c.bf16 %v634, %v631
    %v713 = vsel %vm368, %v710, 0
    %715 = vmatprep.subr.bf16.mxu0 0
    %716 = vmatpush1.bf16.msra.mxu0 0
    %717 = vmatprep.subr.bf16.mxu0 0
    %718 = vmatpush1.bf16.msra.mxu0 0
    %719 = vmatprep.subr.bf16.mxu0 0
    %720 = vmatpush1.bf16.msra.mxu0 0
    %721 = vmatprep.subr.bf16.mxu0 0
    %722 = vmatpush1.bf16.msra.mxu0 0
    %723 = vmatprep.subr.bf16.mxu0 0
    %724 = vmatpush1.bf16.msra.mxu0 0
    %725 = vmatprep.subr.bf16.mxu0 0
    %726 = vmatpush1.bf16.msra.mxu0 0
    %727 = vmatprep.subr.bf16.mxu0 0
    %728 = vmatpush1.bf16.msra.mxu0 0
    %729 = vmatprep.subr.bf16.mxu0 0
    %730 = vmatpush1.bf16.msra.mxu0 %v711
    %731 = vmatprep.subr.bf16.mxu0 0
    %732 = vmatpush2.bf16.msra.mxu0 0
    %733 = vmatprep.subr.bf16.mxu0 0
    %734 = vmatpush2.bf16.msra.mxu0 0
    %735 = vmatprep.subr.bf16.mxu0 0
    %736 = vmatpush2.bf16.msra.mxu0 0
    %737 = vmatprep.subr.bf16.mxu0 0
    %738 = vmatpush2.bf16.msra.mxu0 0
    %739 = vmatprep.subr.bf16.mxu0 0
    %740 = vmatpush2.bf16.msra.mxu0 0
    %741 = vmatprep.subr.bf16.mxu0 0
    %742 = vmatpush2.bf16.msra.mxu0 0
    %743 = vmatprep.subr.bf16.mxu0 0
    %744 = vmatpush2.bf16.msra.mxu0 0
    %745 = vmatprep.subr.bf16.mxu0 0
    %746 = vmatpush2.bf16.msra.mxu0 0
    %747 = vmatprep.mubr.bf16.mxu0 0
    %748 = vmatmul.mubr.bf16.gmra.mxu0 %v713
    %v749 = vpop.f32.mrf.mxu0
    %v750 = vadd.f32 0.0, %v749
    %v751 = vpop.f32.mrf.mxu0
    %v752 = vpop.f32.mrf.mxu0
    %v753 = vadd.f32 0.0, %v752
    %v754 = vpop.f32.mrf.mxu0
    %755 = vdwg.mxu0
    %v756 = vpack.c.bf16 %v753, %v750
    %s757 = scalar_lea.vmem %s3, 4
    %v758 = vld [vmem:[%s757] sm:$0xf]
    %v760 = vsel %vm318, %v756, 0
    %vm762 = vcmask 1043456
    %v764 = vsel %vm762, %v758, 0
    %766 = vmatprep.subr.bf16.mxu0 0
    %767 = vmatpush1.bf16.msra.mxu0 0
    %768 = vmatprep.subr.bf16.mxu0 0
    %769 = vmatpush1.bf16.msra.mxu0 0
    %770 = vmatprep.subr.bf16.mxu0 0
    %771 = vmatpush1.bf16.msra.mxu0 0
    %772 = vmatprep.subr.bf16.mxu0 0
    %773 = vmatpush1.bf16.msra.mxu0 0
    %774 = vmatprep.subr.bf16.mxu0 0
    %775 = vmatpush1.bf16.msra.mxu0 0
    %776 = vmatprep.subr.bf16.mxu0 0
    %777 = vmatpush1.bf16.msra.mxu0 0
    %778 = vmatprep.subr.bf16.mxu0 0
    %779 = vmatpush1.bf16.msra.mxu0 0
    %780 = vmatprep.subr.bf16.mxu0 0
    %781 = vmatpush1.bf16.msra.mxu0 %v764
    %782 = vmatprep.subr.bf16.mxu0 0
    %783 = vmatpush2.bf16.msra.mxu0 0
    %784 = vmatprep.subr.bf16.mxu0 0
    %785 = vmatpush2.bf16.msra.mxu0 0
    %786 = vmatprep.subr.bf16.mxu0 0
    %787 = vmatpush2.bf16.msra.mxu0 0
    %788 = vmatprep.subr.bf16.mxu0 0
    %789 = vmatpush2.bf16.msra.mxu0 0
    %790 = vmatprep.subr.bf16.mxu0 0
    %791 = vmatpush2.bf16.msra.mxu0 0
    %792 = vmatprep.subr.bf16.mxu0 0
    %793 = vmatpush2.bf16.msra.mxu0 0
    %794 = vmatprep.subr.bf16.mxu0 0
    %795 = vmatpush2.bf16.msra.mxu0 0
    %796 = vmatprep.subr.bf16.mxu0 0
    %797 = vmatpush2.bf16.msra.mxu0 0
    %798 = vmatprep.mubr.bf16.mxu0 0
    %799 = vmatmul.mubr.bf16.gmra.mxu0 %v760
    %v800 = vpop.f32.mrf.mxu0
    %v801 = vadd.f32 0.0, %v800
    %v802 = vpop.f32.mrf.mxu0
    %v803 = vpop.f32.mrf.mxu0
    %v804 = vadd.f32 0.0, %v803
    %v805 = vpop.f32.mrf.mxu0
    %806 = vdwg.mxu0
    %v808 = vsel %vm318, %v437, 0
    %v811 = vsel %vm762, %v438, 0
    %813 = vmatprep.subr.bf16.mxu0 0
    %814 = vmatpush1.bf16.msra.mxu0 0
    %815 = vmatprep.subr.bf16.mxu0 0
    %816 = vmatpush1.bf16.msra.mxu0 0
    %817 = vmatprep.subr.bf16.mxu0 0
    %818 = vmatpush1.bf16.msra.mxu0 0
    %819 = vmatprep.subr.bf16.mxu0 0
    %820 = vmatpush1.bf16.msra.mxu0 0
    %821 = vmatprep.subr.bf16.mxu0 0
    %822 = vmatpush1.bf16.msra.mxu0 0
    %823 = vmatprep.subr.bf16.mxu0 0
    %824 = vmatpush1.bf16.msra.mxu0 0
    %825 = vmatprep.subr.bf16.mxu0 0
    %826 = vmatpush1.bf16.msra.mxu0 0
    %827 = vmatprep.subr.bf16.mxu0 0
    %828 = vmatpush1.bf16.msra.mxu0 %v811
    %829 = vmatprep.subr.bf16.mxu0 0
    %830 = vmatpush2.bf16.msra.mxu0 0
    %831 = vmatprep.subr.bf16.mxu0 0
    %832 = vmatpush2.bf16.msra.mxu0 0
    %833 = vmatprep.subr.bf16.mxu0 0
    %834 = vmatpush2.bf16.msra.mxu0 0
    %835 = vmatprep.subr.bf16.mxu0 0
    %836 = vmatpush2.bf16.msra.mxu0 0
    %837 = vmatprep.subr.bf16.mxu0 0
    %838 = vmatpush2.bf16.msra.mxu0 0
    %839 = vmatprep.subr.bf16.mxu0 0
    %840 = vmatpush2.bf16.msra.mxu0 0
    %841 = vmatprep.subr.bf16.mxu0 0
    %842 = vmatpush2.bf16.msra.mxu0 0
    %843 = vmatprep.subr.bf16.mxu0 0
    %844 = vmatpush2.bf16.msra.mxu0 0
    %845 = vmatprep.mubr.bf16.mxu0 0
    %846 = vmatmul.mubr.bf16.gmra.mxu0 %v808
    %v847 = vpop.f32.mrf.mxu0
    %v848 = vadd.f32 %v801, %v847
    %v849 = vpop.f32.mrf.mxu0
    %v850 = vpop.f32.mrf.mxu0
    %v851 = vadd.f32 %v804, %v850
    %v852 = vpop.f32.mrf.mxu0
    %853 = vdwg.mxu0
    %s854 = scalar_lea.vmem [#allocation4], 32
    %v855 = vld [vmem:[%s854] sm:$0xf]
    %v856 = vld [vmem:[%s854 + $0x4] sm:$0xf]
    %v857 = vld [vmem:[%s854 + $0x8] sm:$0xf]
    %v858 = vld [vmem:[%s854 + $0xc] sm:$0xf]
    %s859 = scalar_lea.vmem [#allocation6], 2
    %v860 = vld [vmem:[%s859] sm:$0x1]
    %v862 = vlaneseq
    %v863 = vshrl.u32 %v862, 7
    %v864 = vsub.s32 0, %v863
    %v865 = vrot.slane %v860, %v864
    %v871 = vunpack.c.l.b16 %v855
    %v872 = vunpack.c.l.b16 %v856
    %v873 = vunpack.c.l.b16 %v857
    %v874 = vunpack.c.l.b16 %v858
    %v875 = vpack.c.b16 %v872, %v871
    %v876 = vpack.c.b16 %v874, %v873
    %879 = vmatprep.subr.bf16.mxu0 0
    %880 = vmatpush1.bf16.msra.mxu0 0
    %881 = vmatprep.subr.bf16.mxu0 0
    %882 = vmatpush1.bf16.msra.mxu0 0
    %883 = vmatprep.subr.bf16.mxu0 0
    %884 = vmatpush1.bf16.msra.mxu0 0
    %885 = vmatprep.subr.bf16.mxu0 0
    %886 = vmatpush1.bf16.msra.mxu0 0
    %887 = vmatprep.subr.bf16.mxu0 0
    %888 = vmatpush1.bf16.msra.mxu0 0
    %889 = vmatprep.subr.bf16.mxu0 0
    %890 = vmatpush1.bf16.msra.mxu0 0
    %891 = vmatprep.subr.bf16.mxu0 0
    %892 = vmatpush1.bf16.msra.mxu0 %v876
    %893 = vmatprep.subr.bf16.mxu0 0
    %894 = vmatpush1.bf16.msra.mxu0 %v875
    %895 = vmatprep.subr.bf16.mxu0 0
    %896 = vmatpush2.bf16.msra.mxu0 0
    %897 = vmatprep.subr.bf16.mxu0 0
    %898 = vmatpush2.bf16.msra.mxu0 0
    %899 = vmatprep.subr.bf16.mxu0 0
    %900 = vmatpush2.bf16.msra.mxu0 0
    %901 = vmatprep.subr.bf16.mxu0 0
    %902 = vmatpush2.bf16.msra.mxu0 0
    %903 = vmatprep.subr.bf16.mxu0 0
    %904 = vmatpush2.bf16.msra.mxu0 0
    %905 = vmatprep.subr.bf16.mxu0 0
    %906 = vmatpush2.bf16.msra.mxu0 0
    %907 = vmatprep.subr.bf16.mxu0 0
    %908 = vmatpush2.bf16.msra.mxu0 0
    %909 = vmatprep.subr.bf16.mxu0 0
    %910 = vmatpush2.bf16.msra.mxu0 0
    %911 = vmatprep.mubr.bf16.mxu0 0
    %912 = vmatmul.mubr.bf16.gmra.mxu0 %v141
    %v913 = vpop.f32.mrf.mxu0
    %v914 = vadd.f32 %v865, %v913
    %v915 = vpop.f32.mrf.mxu0
    %v916 = vpop.f32.mrf.mxu0
    %v917 = vadd.f32 %v865, %v916
    %v918 = vpop.f32.mrf.mxu0
    %919 = vdwg.mxu0
    %s920 = scalar_lea.vmem [#allocation4], 96
    %v921 = vld [vmem:[%s920] sm:$0xf]
    %v922 = vld [vmem:[%s920 + $0x4] sm:$0xf]
    %v923 = vld [vmem:[%s920 + $0x8] sm:$0xf]
    %v924 = vld [vmem:[%s920 + $0xc] sm:$0xf]
    %s925 = scalar_lea.vmem [#allocation6], 6
    %v926 = vld [vmem:[%s925] sm:$0x1]
    %v928 = vlaneseq
    %v929 = vshrl.u32 %v928, 7
    %v930 = vsub.s32 0, %v929
    %v931 = vrot.slane %v926, %v930
    %v937 = vunpack.c.l.b16 %v921
    %v938 = vunpack.c.l.b16 %v922
    %v939 = vunpack.c.l.b16 %v923
    %v940 = vunpack.c.l.b16 %v924
    %v941 = vpack.c.b16 %v938, %v937
    %v942 = vpack.c.b16 %v940, %v939
    %945 = vmatprep.subr.bf16.mxu0 0
    %946 = vmatpush1.bf16.msra.mxu0 0
    %947 = vmatprep.subr.bf16.mxu0 0
    %948 = vmatpush1.bf16.msra.mxu0 0
    %949 = vmatprep.subr.bf16.mxu0 0
    %950 = vmatpush1.bf16.msra.mxu0 0
    %951 = vmatprep.subr.bf16.mxu0 0
    %952 = vmatpush1.bf16.msra.mxu0 0
    %953 = vmatprep.subr.bf16.mxu0 0
    %954 = vmatpush1.bf16.msra.mxu0 0
    %955 = vmatprep.subr.bf16.mxu0 0
    %956 = vmatpush1.bf16.msra.mxu0 0
    %957 = vmatprep.subr.bf16.mxu0 0
    %958 = vmatpush1.bf16.msra.mxu0 %v942
    %959 = vmatprep.subr.bf16.mxu0 0
    %960 = vmatpush1.bf16.msra.mxu0 %v941
    %961 = vmatprep.subr.bf16.mxu0 0
    %962 = vmatpush2.bf16.msra.mxu0 0
    %963 = vmatprep.subr.bf16.mxu0 0
    %964 = vmatpush2.bf16.msra.mxu0 0
    %965 = vmatprep.subr.bf16.mxu0 0
    %966 = vmatpush2.bf16.msra.mxu0 0
    %967 = vmatprep.subr.bf16.mxu0 0
    %968 = vmatpush2.bf16.msra.mxu0 0
    %969 = vmatprep.subr.bf16.mxu0 0
    %970 = vmatpush2.bf16.msra.mxu0 0
    %971 = vmatprep.subr.bf16.mxu0 0
    %972 = vmatpush2.bf16.msra.mxu0 0
    %973 = vmatprep.subr.bf16.mxu0 0
    %974 = vmatpush2.bf16.msra.mxu0 0
    %975 = vmatprep.subr.bf16.mxu0 0
    %976 = vmatpush2.bf16.msra.mxu0 0
    %977 = vmatprep.mubr.bf16.mxu0 0
    %978 = vmatmul.mubr.bf16.gmra.mxu0 %v141
    %v979 = vpop.f32.mrf.mxu0
    %v980 = vadd.f32 %v931, %v979
    %v981 = vpop.f32.mrf.mxu0
    %v982 = vpop.f32.mrf.mxu0
    %v983 = vadd.f32 %v931, %v982
    %v984 = vpop.f32.mrf.mxu0
    %985 = vdwg.mxu0
    %s986 = scalar_lea.vmem [#allocation4], 160
    %v987 = vld [vmem:[%s986] sm:$0xf]
    %v988 = vld [vmem:[%s986 + $0x4] sm:$0xf]
    %v989 = vld [vmem:[%s986 + $0x8] sm:$0xf]
    %v990 = vld [vmem:[%s986 + $0xc] sm:$0xf]
    %s991 = scalar_lea.vmem [#allocation6], 10
    %v992 = vld [vmem:[%s991] sm:$0x1]
    %v994 = vlaneseq
    %v995 = vshrl.u32 %v994, 7
    %v996 = vsub.s32 0, %v995
    %v997 = vrot.slane %v992, %v996
    %v1003 = vunpack.c.l.b16 %v987
    %v1004 = vunpack.c.l.b16 %v988
    %v1005 = vunpack.c.l.b16 %v989
    %v1006 = vunpack.c.l.b16 %v990
    %v1007 = vpack.c.b16 %v1004, %v1003
    %v1008 = vpack.c.b16 %v1006, %v1005
    %1011 = vmatprep.subr.bf16.mxu0 0
    %1012 = vmatpush1.bf16.msra.mxu0 0
    %1013 = vmatprep.subr.bf16.mxu0 0
    %1014 = vmatpush1.bf16.msra.mxu0 0
    %1015 = vmatprep.subr.bf16.mxu0 0
    %1016 = vmatpush1.bf16.msra.mxu0 0
    %1017 = vmatprep.subr.bf16.mxu0 0
    %1018 = vmatpush1.bf16.msra.mxu0 0
    %1019 = vmatprep.subr.bf16.mxu0 0
    %1020 = vmatpush1.bf16.msra.mxu0 0
    %1021 = vmatprep.subr.bf16.mxu0 0
    %1022 = vmatpush1.bf16.msra.mxu0 0
    %1023 = vmatprep.subr.bf16.mxu0 0
    %1024 = vmatpush1.bf16.msra.mxu0 %v1008
    %1025 = vmatprep.subr.bf16.mxu0 0
    %1026 = vmatpush1.bf16.msra.mxu0 %v1007
    %1027 = vmatprep.subr.bf16.mxu0 0
    %1028 = vmatpush2.bf16.msra.mxu0 0
    %1029 = vmatprep.subr.bf16.mxu0 0
    %1030 = vmatpush2.bf16.msra.mxu0 0
    %1031 = vmatprep.subr.bf16.mxu0 0
    %1032 = vmatpush2.bf16.msra.mxu0 0
    %1033 = vmatprep.subr.bf16.mxu0 0
    %1034 = vmatpush2.bf16.msra.mxu0 0
    %1035 = vmatprep.subr.bf16.mxu0 0
    %1036 = vmatpush2.bf16.msra.mxu0 0
    %1037 = vmatprep.subr.bf16.mxu0 0
    %1038 = vmatpush2.bf16.msra.mxu0 0
    %1039 = vmatprep.subr.bf16.mxu0 0
    %1040 = vmatpush2.bf16.msra.mxu0 0
    %1041 = vmatprep.subr.bf16.mxu0 0
    %1042 = vmatpush2.bf16.msra.mxu0 0
    %1043 = vmatprep.mubr.bf16.mxu0 0
    %1044 = vmatmul.mubr.bf16.gmra.mxu0 %v141
    %v1045 = vpop.f32.mrf.mxu0
    %v1046 = vadd.f32 %v997, %v1045
    %v1047 = vpop.f32.mrf.mxu0
    %v1048 = vpop.f32.mrf.mxu0
    %v1049 = vadd.f32 %v997, %v1048
    %v1050 = vpop.f32.mrf.mxu0
    %1051 = vdwg.mxu0
    %v1052 = vpack.c.bf16 %v917, %v914
    %v1053 = vpack.c.bf16 %v983, %v980
    %v1055 = vsel %vm318, %v1052, 0
    %v1058 = vsel %vm318, %v1053, 0
    %1060 = vmatprep.subr.bf16.mxu0 0
    %1061 = vmatpush1.bf16.xpose.msra.mxu0 0
    %1062 = vmatprep.subr.bf16.mxu0 0
    %1063 = vmatpush1.bf16.xpose.msra.mxu0 0
    %1064 = vmatprep.subr.bf16.mxu0 0
    %1065 = vmatpush1.bf16.xpose.msra.mxu0 0
    %1066 = vmatprep.subr.bf16.mxu0 0
    %1067 = vmatpush1.bf16.xpose.msra.mxu0 0
    %1068 = vmatprep.subr.bf16.mxu0 0
    %1069 = vmatpush1.bf16.xpose.msra.mxu0 0
    %1070 = vmatprep.subr.bf16.mxu0 0
    %1071 = vmatpush1.bf16.xpose.msra.mxu0 0
    %1072 = vmatprep.subr.bf16.mxu0 0
    %1073 = vmatpush1.bf16.xpose.msra.mxu0 0
    %1074 = vmatprep.subr.bf16.mxu0 0
    %1075 = vmatpush1.bf16.xpose.msra.mxu0 %v1058
    %1076 = vmatprep.subr.bf16.mxu0 0
    %1077 = vmatpush2.bf16.xpose.msra.mxu0 0
    %1078 = vmatprep.subr.bf16.mxu0 0
    %1079 = vmatpush2.bf16.xpose.msra.mxu0 0
    %1080 = vmatprep.subr.bf16.mxu0 0
    %1081 = vmatpush2.bf16.xpose.msra.mxu0 0
    %1082 = vmatprep.subr.bf16.mxu0 0
    %1083 = vmatpush2.bf16.xpose.msra.mxu0 0
    %1084 = vmatprep.subr.bf16.mxu0 0
    %1085 = vmatpush2.bf16.xpose.msra.mxu0 0
    %1086 = vmatprep.subr.bf16.mxu0 0
    %1087 = vmatpush2.bf16.xpose.msra.mxu0 0
    %1088 = vmatprep.subr.bf16.mxu0 0
    %1089 = vmatpush2.bf16.xpose.msra.mxu0 0
    %1090 = vmatprep.subr.bf16.mxu0 0
    %1091 = vmatpush2.bf16.xpose.msra.mxu0 0
    %1092 = vmatprep.mubr.bf16.mxu0 0
    %1093 = vmatmul.mubr.bf16.gmra.mxu0 %v1055
    %v1094 = vpop.f32.mrf.mxu0
    %v1095 = vadd.f32 0.0, %v1094
    %v1096 = vpop.f32.mrf.mxu0
    %v1097 = vpop.f32.mrf.mxu0
    %v1098 = vadd.f32 0.0, %v1097
    %v1099 = vpop.f32.mrf.mxu0
    %1100 = vdwg.mxu0
    %v1101 = vmul.f32 %v1095, 0.35355338
    %v1102 = vmul.f32 %v1098, 0.35355338
    %v1103 = vsel %vm368, %v1101, -inf
    %1104 = vmax.xlane.f32.xlu0 %v1103
    %v1105 = vpop.xlane.xlu0 %1104
    %v1106 = vsel %vm368, %v1102, -inf
    %1107 = vmax.xlane.f32.xlu0 %v1106
    %v1108 = vpop.xlane.xlu0 %1107
    %v1109 = vsub.f32 %v1101, %v1105
    %v1110 = vsub.f32 %v1102, %v1108
    %v1111 = vmul.f32 %v1109, 1.442695
    %v1112 = vpow.pop %v1111
    %v1113 = vmul.f32 %v1110, 1.442695
    %v1114 = vpow.pop %v1113
    %v1115 = vsel %vm368, %v1112, 0.0
    %1116 = vadd.xlane.f32.xlu0 %v1115
    %v1117 = vpop.xlane.xlu0 %1116
    %v1118 = vsel %vm368, %v1114, 0.0
    %1119 = vadd.xlane.f32.xlu0 %v1118
    %v1120 = vpop.xlane.xlu0 %1119
    %v1121 = vrcp.pop %v1117
    %v1122 = vrcp.pop %v1120
    %v1123 = vmul.f32 %v1112, %v1121
    %v1124 = vmul.f32 %v1114, %v1122
    %v1125 = vpack.c.bf16 %v1124, %v1123
    %v1126 = vpack.c.bf16 %v1049, %v1046
    %v1128 = vsel %vm368, %v1125, 0
    %1130 = vmatprep.subr.bf16.mxu0 0
    %1131 = vmatpush1.bf16.msra.mxu0 0
    %1132 = vmatprep.subr.bf16.mxu0 0
    %1133 = vmatpush1.bf16.msra.mxu0 0
    %1134 = vmatprep.subr.bf16.mxu0 0
    %1135 = vmatpush1.bf16.msra.mxu0 0
    %1136 = vmatprep.subr.bf16.mxu0 0
    %1137 = vmatpush1.bf16.msra.mxu0 0
    %1138 = vmatprep.subr.bf16.mxu0 0
    %1139 = vmatpush1.bf16.msra.mxu0 0
    %1140 = vmatprep.subr.bf16.mxu0 0
    %1141 = vmatpush1.bf16.msra.mxu0 0
    %1142 = vmatprep.subr.bf16.mxu0 0
    %1143 = vmatpush1.bf16.msra.mxu0 0
    %1144 = vmatprep.subr.bf16.mxu0 0
    %1145 = vmatpush1.bf16.msra.mxu0 %v1126
    %1146 = vmatprep.subr.bf16.mxu0 0
    %1147 = vmatpush2.bf16.msra.mxu0 0
    %1148 = vmatprep.subr.bf16.mxu0 0
    %1149 = vmatpush2.bf16.msra.mxu0 0
    %1150 = vmatprep.subr.bf16.mxu0 0
    %1151 = vmatpush2.bf16.msra.mxu0 0
    %1152 = vmatprep.subr.bf16.mxu0 0
    %1153 = vmatpush2.bf16.msra.mxu0 0
    %1154 = vmatprep.subr.bf16.mxu0 0
    %1155 = vmatpush2.bf16.msra.mxu0 0
    %1156 = vmatprep.subr.bf16.mxu0 0
    %1157 = vmatpush2.bf16.msra.mxu0 0
    %1158 = vmatprep.subr.bf16.mxu0 0
    %1159 = vmatpush2.bf16.msra.mxu0 0
    %1160 = vmatprep.subr.bf16.mxu0 0
    %1161 = vmatpush2.bf16.msra.mxu0 0
    %1162 = vmatprep.mubr.bf16.mxu0 0
    %1163 = vmatmul.mubr.bf16.gmra.mxu0 %v1128
    %v1164 = vpop.f32.mrf.mxu0
    %v1165 = vadd.f32 0.0, %v1164
    %v1166 = vpop.f32.mrf.mxu0
    %v1167 = vpop.f32.mrf.mxu0
    %v1168 = vadd.f32 0.0, %v1167
    %v1169 = vpop.f32.mrf.mxu0
    %1170 = vdwg.mxu0
    %v1171 = vpack.c.bf16 %v1168, %v1165
    %s1172 = scalar_lea.vmem %s3, 8
    %v1173 = vld [vmem:[%s1172] sm:$0xf]
    %v1175 = vsel %vm318, %v1171, 0
    %v1178 = vsel %vm762, %v1173, 0
    %1180 = vmatprep.subr.bf16.mxu0 0
    %1181 = vmatpush1.bf16.msra.mxu0 0
    %1182 = vmatprep.subr.bf16.mxu0 0
    %1183 = vmatpush1.bf16.msra.mxu0 0
    %1184 = vmatprep.subr.bf16.mxu0 0
    %1185 = vmatpush1.bf16.msra.mxu0 0
    %1186 = vmatprep.subr.bf16.mxu0 0
    %1187 = vmatpush1.bf16.msra.mxu0 0
    %1188 = vmatprep.subr.bf16.mxu0 0
    %1189 = vmatpush1.bf16.msra.mxu0 0
    %1190 = vmatprep.subr.bf16.mxu0 0
    %1191 = vmatpush1.bf16.msra.mxu0 0
    %1192 = vmatprep.subr.bf16.mxu0 0
    %1193 = vmatpush1.bf16.msra.mxu0 0
    %1194 = vmatprep.subr.bf16.mxu0 0
    %1195 = vmatpush1.bf16.msra.mxu0 %v1178
    %1196 = vmatprep.subr.bf16.mxu0 0
    %1197 = vmatpush2.bf16.msra.mxu0 0
    %1198 = vmatprep.subr.bf16.mxu0 0
    %1199 = vmatpush2.bf16.msra.mxu0 0
    %1200 = vmatprep.subr.bf16.mxu0 0
    %1201 = vmatpush2.bf16.msra.mxu0 0
    %1202 = vmatprep.subr.bf16.mxu0 0
    %1203 = vmatpush2.bf16.msra.mxu0 0
    %1204 = vmatprep.subr.bf16.mxu0 0
    %1205 = vmatpush2.bf16.msra.mxu0 0
    %1206 = vmatprep.subr.bf16.mxu0 0
    %1207 = vmatpush2.bf16.msra.mxu0 0
    %1208 = vmatprep.subr.bf16.mxu0 0
    %1209 = vmatpush2.bf16.msra.mxu0 0
    %1210 = vmatprep.subr.bf16.mxu0 0
    %1211 = vmatpush2.bf16.msra.mxu0 0
    %1212 = vmatprep.mubr.bf16.mxu0 0
    %1213 = vmatmul.mubr.bf16.gmra.mxu0 %v1175
    %v1214 = vpop.f32.mrf.mxu0
    %v1215 = vadd.f32 0.0, %v1214
    %v1216 = vpop.f32.mrf.mxu0
    %v1217 = vpop.f32.mrf.mxu0
    %v1218 = vadd.f32 0.0, %v1217
    %v1219 = vpop.f32.mrf.mxu0
    %1220 = vdwg.mxu0
    %v1221 = vadd.f32 %v848, %v1215
    %v1222 = vadd.f32 %v851, %v1218
    %s1223 = scalar_lea.vmem [#allocation4], 48
    %v1224 = vld [vmem:[%s1223] sm:$0xf]
    %v1225 = vld [vmem:[%s1223 + $0x4] sm:$0xf]
    %v1226 = vld [vmem:[%s1223 + $0x8] sm:$0xf]
    %v1227 = vld [vmem:[%s1223 + $0xc] sm:$0xf]
    %s1228 = scalar_lea.vmem [#allocation6], 3
    %v1229 = vld [vmem:[%s1228] sm:$0x1]
    %v1231 = vlaneseq
    %v1232 = vshrl.u32 %v1231, 7
    %v1233 = vsub.s32 0, %v1232
    %v1234 = vrot.slane %v1229, %v1233
    %v1240 = vunpack.c.l.b16 %v1224
    %v1241 = vunpack.c.l.b16 %v1225
    %v1242 = vunpack.c.l.b16 %v1226
    %v1243 = vunpack.c.l.b16 %v1227
    %v1244 = vpack.c.b16 %v1241, %v1240
    %v1245 = vpack.c.b16 %v1243, %v1242
    %1248 = vmatprep.subr.bf16.mxu0 0
    %1249 = vmatpush1.bf16.msra.mxu0 0
    %1250 = vmatprep.subr.bf16.mxu0 0
    %1251 = vmatpush1.bf16.msra.mxu0 0
    %1252 = vmatprep.subr.bf16.mxu0 0
    %1253 = vmatpush1.bf16.msra.mxu0 0
    %1254 = vmatprep.subr.bf16.mxu0 0
    %1255 = vmatpush1.bf16.msra.mxu0 0
    %1256 = vmatprep.subr.bf16.mxu0 0
    %1257 = vmatpush1.bf16.msra.mxu0 0
    %1258 = vmatprep.subr.bf16.mxu0 0
    %1259 = vmatpush1.bf16.msra.mxu0 0
    %1260 = vmatprep.subr.bf16.mxu0 0
    %1261 = vmatpush1.bf16.msra.mxu0 %v1245
    %1262 = vmatprep.subr.bf16.mxu0 0
    %1263 = vmatpush1.bf16.msra.mxu0 %v1244
    %1264 = vmatprep.subr.bf16.mxu0 0
    %1265 = vmatpush2.bf16.msra.mxu0 0
    %1266 = vmatprep.subr.bf16.mxu0 0
    %1267 = vmatpush2.bf16.msra.mxu0 0
    %1268 = vmatprep.subr.bf16.mxu0 0
    %1269 = vmatpush2.bf16.msra.mxu0 0
    %1270 = vmatprep.subr.bf16.mxu0 0
    %1271 = vmatpush2.bf16.msra.mxu0 0
    %1272 = vmatprep.subr.bf16.mxu0 0
    %1273 = vmatpush2.bf16.msra.mxu0 0
    %1274 = vmatprep.subr.bf16.mxu0 0
    %1275 = vmatpush2.bf16.msra.mxu0 0
    %1276 = vmatprep.subr.bf16.mxu0 0
    %1277 = vmatpush2.bf16.msra.mxu0 0
    %1278 = vmatprep.subr.bf16.mxu0 0
    %1279 = vmatpush2.bf16.msra.mxu0 0
    %1280 = vmatprep.mubr.bf16.mxu0 0
    %1281 = vmatmul.mubr.bf16.gmra.mxu0 %v141
    %v1282 = vpop.f32.mrf.mxu0
    %v1283 = vadd.f32 %v1234, %v1282
    %v1284 = vpop.f32.mrf.mxu0
    %v1285 = vpop.f32.mrf.mxu0
    %v1286 = vadd.f32 %v1234, %v1285
    %v1287 = vpop.f32.mrf.mxu0
    %1288 = vdwg.mxu0
    %s1289 = scalar_lea.vmem [#allocation4], 112
    %v1290 = vld [vmem:[%s1289] sm:$0xf]
    %v1291 = vld [vmem:[%s1289 + $0x4] sm:$0xf]
    %v1292 = vld [vmem:[%s1289 + $0x8] sm:$0xf]
    %v1293 = vld [vmem:[%s1289 + $0xc] sm:$0xf]
    %s1294 = scalar_lea.vmem [#allocation6], 7
    %v1295 = vld [vmem:[%s1294] sm:$0x1]
    %v1297 = vlaneseq
    %v1298 = vshrl.u32 %v1297, 7
    %v1299 = vsub.s32 0, %v1298
    %v1300 = vrot.slane %v1295, %v1299
    %v1306 = vunpack.c.l.b16 %v1290
    %v1307 = vunpack.c.l.b16 %v1291
    %v1308 = vunpack.c.l.b16 %v1292
    %v1309 = vunpack.c.l.b16 %v1293
    %v1310 = vpack.c.b16 %v1307, %v1306
    %v1311 = vpack.c.b16 %v1309, %v1308
    %1314 = vmatprep.subr.bf16.mxu0 0
    %1315 = vmatpush1.bf16.msra.mxu0 0
    %1316 = vmatprep.subr.bf16.mxu0 0
    %1317 = vmatpush1.bf16.msra.mxu0 0
    %1318 = vmatprep.subr.bf16.mxu0 0
    %1319 = vmatpush1.bf16.msra.mxu0 0
    %1320 = vmatprep.subr.bf16.mxu0 0
    %1321 = vmatpush1.bf16.msra.mxu0 0
    %1322 = vmatprep.subr.bf16.mxu0 0
    %1323 = vmatpush1.bf16.msra.mxu0 0
    %1324 = vmatprep.subr.bf16.mxu0 0
    %1325 = vmatpush1.bf16.msra.mxu0 0
    %1326 = vmatprep.subr.bf16.mxu0 0
    %1327 = vmatpush1.bf16.msra.mxu0 %v1311
    %1328 = vmatprep.subr.bf16.mxu0 0
    %1329 = vmatpush1.bf16.msra.mxu0 %v1310
    %1330 = vmatprep.subr.bf16.mxu0 0
    %1331 = vmatpush2.bf16.msra.mxu0 0
    %1332 = vmatprep.subr.bf16.mxu0 0
    %1333 = vmatpush2.bf16.msra.mxu0 0
    %1334 = vmatprep.subr.bf16.mxu0 0
    %1335 = vmatpush2.bf16.msra.mxu0 0
    %1336 = vmatprep.subr.bf16.mxu0 0
    %1337 = vmatpush2.bf16.msra.mxu0 0
    %1338 = vmatprep.subr.bf16.mxu0 0
    %1339 = vmatpush2.bf16.msra.mxu0 0
    %1340 = vmatprep.subr.bf16.mxu0 0
    %1341 = vmatpush2.bf16.msra.mxu0 0
    %1342 = vmatprep.subr.bf16.mxu0 0
    %1343 = vmatpush2.bf16.msra.mxu0 0
    %1344 = vmatprep.subr.bf16.mxu0 0
    %1345 = vmatpush2.bf16.msra.mxu0 0
    %1346 = vmatprep.mubr.bf16.mxu0 0
    %1347 = vmatmul.mubr.bf16.gmra.mxu0 %v141
    %v1348 = vpop.f32.mrf.mxu0
    %v1349 = vadd.f32 %v1300, %v1348
    %v1350 = vpop.f32.mrf.mxu0
    %v1351 = vpop.f32.mrf.mxu0
    %v1352 = vadd.f32 %v1300, %v1351
    %v1353 = vpop.f32.mrf.mxu0
    %1354 = vdwg.mxu0
    %s1355 = scalar_lea.vmem [#allocation4], 176
    %v1356 = vld [vmem:[%s1355] sm:$0xf]
    %v1357 = vld [vmem:[%s1355 + $0x4] sm:$0xf]
    %v1358 = vld [vmem:[%s1355 + $0x8] sm:$0xf]
    %v1359 = vld [vmem:[%s1355 + $0xc] sm:$0xf]
    %s1360 = scalar_lea.vmem [#allocation6], 11
    %v1361 = vld [vmem:[%s1360] sm:$0x1]
    %v1363 = vlaneseq
    %v1364 = vshrl.u32 %v1363, 7
    %v1365 = vsub.s32 0, %v1364
    %v1366 = vrot.slane %v1361, %v1365
    %v1372 = vunpack.c.l.b16 %v1356
    %v1373 = vunpack.c.l.b16 %v1357
    %v1374 = vunpack.c.l.b16 %v1358
    %v1375 = vunpack.c.l.b16 %v1359
    %v1376 = vpack.c.b16 %v1373, %v1372
    %v1377 = vpack.c.b16 %v1375, %v1374
    %1380 = vmatprep.subr.bf16.mxu0 0
    %1381 = vmatpush1.bf16.msra.mxu0 0
    %1382 = vmatprep.subr.bf16.mxu0 0
    %1383 = vmatpush1.bf16.msra.mxu0 0
    %1384 = vmatprep.subr.bf16.mxu0 0
    %1385 = vmatpush1.bf16.msra.mxu0 0
    %1386 = vmatprep.subr.bf16.mxu0 0
    %1387 = vmatpush1.bf16.msra.mxu0 0
    %1388 = vmatprep.subr.bf16.mxu0 0
    %1389 = vmatpush1.bf16.msra.mxu0 0
    %1390 = vmatprep.subr.bf16.mxu0 0
    %1391 = vmatpush1.bf16.msra.mxu0 0
    %1392 = vmatprep.subr.bf16.mxu0 0
    %1393 = vmatpush1.bf16.msra.mxu0 %v1377
    %1394 = vmatprep.subr.bf16.mxu0 0
    %1395 = vmatpush1.bf16.msra.mxu0 %v1376
    %1396 = vmatprep.subr.bf16.mxu0 0
    %1397 = vmatpush2.bf16.msra.mxu0 0
    %1398 = vmatprep.subr.bf16.mxu0 0
    %1399 = vmatpush2.bf16.msra.mxu0 0
    %1400 = vmatprep.subr.bf16.mxu0 0
    %1401 = vmatpush2.bf16.msra.mxu0 0
    %1402 = vmatprep.subr.bf16.mxu0 0
    %1403 = vmatpush2.bf16.msra.mxu0 0
    %1404 = vmatprep.subr.bf16.mxu0 0
    %1405 = vmatpush2.bf16.msra.mxu0 0
    %1406 = vmatprep.subr.bf16.mxu0 0
    %1407 = vmatpush2.bf16.msra.mxu0 0
    %1408 = vmatprep.subr.bf16.mxu0 0
    %1409 = vmatpush2.bf16.msra.mxu0 0
    %1410 = vmatprep.subr.bf16.mxu0 0
    %1411 = vmatpush2.bf16.msra.mxu0 0
    %1412 = vmatprep.mubr.bf16.mxu0 0
    %1413 = vmatmul.mubr.bf16.gmra.mxu0 %v141
    %v1414 = vpop.f32.mrf.mxu0
    %v1415 = vadd.f32 %v1366, %v1414
    %v1416 = vpop.f32.mrf.mxu0
    %v1417 = vpop.f32.mrf.mxu0
    %v1418 = vadd.f32 %v1366, %v1417
    %v1419 = vpop.f32.mrf.mxu0
    %1420 = vdwg.mxu0
    %v1421 = vpack.c.bf16 %v1286, %v1283
    %v1422 = vpack.c.bf16 %v1352, %v1349
    %v1424 = vsel %vm318, %v1421, 0
    %v1427 = vsel %vm318, %v1422, 0
    %1429 = vmatprep.subr.bf16.mxu0 0
    %1430 = vmatpush1.bf16.xpose.msra.mxu0 0
    %1431 = vmatprep.subr.bf16.mxu0 0
    %1432 = vmatpush1.bf16.xpose.msra.mxu0 0
    %1433 = vmatprep.subr.bf16.mxu0 0
    %1434 = vmatpush1.bf16.xpose.msra.mxu0 0
    %1435 = vmatprep.subr.bf16.mxu0 0
    %1436 = vmatpush1.bf16.xpose.msra.mxu0 0
    %1437 = vmatprep.subr.bf16.mxu0 0
    %1438 = vmatpush1.bf16.xpose.msra.mxu0 0
    %1439 = vmatprep.subr.bf16.mxu0 0
    %1440 = vmatpush1.bf16.xpose.msra.mxu0 0
    %1441 = vmatprep.subr.bf16.mxu0 0
    %1442 = vmatpush1.bf16.xpose.msra.mxu0 0
    %1443 = vmatprep.subr.bf16.mxu0 0
    %1444 = vmatpush1.bf16.xpose.msra.mxu0 %v1427
    %1445 = vmatprep.subr.bf16.mxu0 0
    %1446 = vmatpush2.bf16.xpose.msra.mxu0 0
    %1447 = vmatprep.subr.bf16.mxu0 0
    %1448 = vmatpush2.bf16.xpose.msra.mxu0 0
    %1449 = vmatprep.subr.bf16.mxu0 0
    %1450 = vmatpush2.bf16.xpose.msra.mxu0 0
    %1451 = vmatprep.subr.bf16.mxu0 0
    %1452 = vmatpush2.bf16.xpose.msra.mxu0 0
    %1453 = vmatprep.subr.bf16.mxu0 0
    %1454 = vmatpush2.bf16.xpose.msra.mxu0 0
    %1455 = vmatprep.subr.bf16.mxu0 0
    %1456 = vmatpush2.bf16.xpose.msra.mxu0 0
    %1457 = vmatprep.subr.bf16.mxu0 0
    %1458 = vmatpush2.bf16.xpose.msra.mxu0 0
    %1459 = vmatprep.subr.bf16.mxu0 0
    %1460 = vmatpush2.bf16.xpose.msra.mxu0 0
    %1461 = vmatprep.mubr.bf16.mxu0 0
    %1462 = vmatmul.mubr.bf16.gmra.mxu0 %v1424
    %v1463 = vpop.f32.mrf.mxu0
    %v1464 = vadd.f32 0.0, %v1463
    %v1465 = vpop.f32.mrf.mxu0
    %v1466 = vpop.f32.mrf.mxu0
    %v1467 = vadd.f32 0.0, %v1466
    %v1468 = vpop.f32.mrf.mxu0
    %1469 = vdwg.mxu0
    %v1470 = vmul.f32 %v1464, 0.35355338
    %v1471 = vmul.f32 %v1467, 0.35355338
    %v1472 = vsel %vm368, %v1470, -inf
    %1473 = vmax.xlane.f32.xlu0 %v1472
    %v1474 = vpop.xlane.xlu0 %1473
    %v1475 = vsel %vm368, %v1471, -inf
    %1476 = vmax.xlane.f32.xlu0 %v1475
    %v1477 = vpop.xlane.xlu0 %1476
    %v1478 = vsub.f32 %v1470, %v1474
    %v1479 = vsub.f32 %v1471, %v1477
    %v1480 = vmul.f32 %v1478, 1.442695
    %v1481 = vpow.pop %v1480
    %v1482 = vmul.f32 %v1479, 1.442695
    %v1483 = vpow.pop %v1482
    %v1484 = vsel %vm368, %v1481, 0.0
    %1485 = vadd.xlane.f32.xlu0 %v1484
    %v1486 = vpop.xlane.xlu0 %1485
    %v1487 = vsel %vm368, %v1483, 0.0
    %1488 = vadd.xlane.f32.xlu0 %v1487
    %v1489 = vpop.xlane.xlu0 %1488
    %v1490 = vrcp.pop %v1486
    %v1491 = vrcp.pop %v1489
    %v1492 = vmul.f32 %v1481, %v1490
    %v1493 = vmul.f32 %v1483, %v1491
    %v1494 = vpack.c.bf16 %v1493, %v1492
    %v1495 = vpack.c.bf16 %v1418, %v1415
    %v1497 = vsel %vm368, %v1494, 0
    %1499 = vmatprep.subr.bf16.mxu0 0
    %1500 = vmatpush1.bf16.msra.mxu0 0
    %1501 = vmatprep.subr.bf16.mxu0 0
    %1502 = vmatpush1.bf16.msra.mxu0 0
    %1503 = vmatprep.subr.bf16.mxu0 0
    %1504 = vmatpush1.bf16.msra.mxu0 0
    %1505 = vmatprep.subr.bf16.mxu0 0
    %1506 = vmatpush1.bf16.msra.mxu0 0
    %1507 = vmatprep.subr.bf16.mxu0 0
    %1508 = vmatpush1.bf16.msra.mxu0 0
    %1509 = vmatprep.subr.bf16.mxu0 0
    %1510 = vmatpush1.bf16.msra.mxu0 0
    %1511 = vmatprep.subr.bf16.mxu0 0
    %1512 = vmatpush1.bf16.msra.mxu0 0
    %1513 = vmatprep.subr.bf16.mxu0 0
    %1514 = vmatpush1.bf16.msra.mxu0 %v1495
    %1515 = vmatprep.subr.bf16.mxu0 0
    %1516 = vmatpush2.bf16.msra.mxu0 0
    %1517 = vmatprep.subr.bf16.mxu0 0
    %1518 = vmatpush2.bf16.msra.mxu0 0
    %1519 = vmatprep.subr.bf16.mxu0 0
    %1520 = vmatpush2.bf16.msra.mxu0 0
    %1521 = vmatprep.subr.bf16.mxu0 0
    %1522 = vmatpush2.bf16.msra.mxu0 0
    %1523 = vmatprep.subr.bf16.mxu0 0
    %1524 = vmatpush2.bf16.msra.mxu0 0
    %1525 = vmatprep.subr.bf16.mxu0 0
    %1526 = vmatpush2.bf16.msra.mxu0 0
    %1527 = vmatprep.subr.bf16.mxu0 0
    %1528 = vmatpush2.bf16.msra.mxu0 0
    %1529 = vmatprep.subr.bf16.mxu0 0
    %1530 = vmatpush2.bf16.msra.mxu0 0
    %1531 = vmatprep.mubr.bf16.mxu0 0
    %1532 = vmatmul.mubr.bf16.gmra.mxu0 %v1497
    %v1533 = vpop.f32.mrf.mxu0
    %v1534 = vadd.f32 0.0, %v1533
    %v1535 = vpop.f32.mrf.mxu0
    %v1536 = vpop.f32.mrf.mxu0
    %v1537 = vadd.f32 0.0, %v1536
    %v1538 = vpop.f32.mrf.mxu0
    %1539 = vdwg.mxu0
    %v1540 = vpack.c.bf16 %v1537, %v1534
    %s1541 = scalar_lea.vmem %s3, 12
    %v1542 = vld [vmem:[%s1541] sm:$0xf]
    %v1544 = vsel %vm318, %v1540, 0
    %v1547 = vsel %vm762, %v1542, 0
    %1549 = vmatprep.subr.bf16.mxu0 0
    %1550 = vmatpush1.bf16.msra.mxu0 0
    %1551 = vmatprep.subr.bf16.mxu0 0
    %1552 = vmatpush1.bf16.msra.mxu0 0
    %1553 = vmatprep.subr.bf16.mxu0 0
    %1554 = vmatpush1.bf16.msra.mxu0 0
    %1555 = vmatprep.subr.bf16.mxu0 0
    %1556 = vmatpush1.bf16.msra.mxu0 0
    %1557 = vmatprep.subr.bf16.mxu0 0
    %1558 = vmatpush1.bf16.msra.mxu0 0
    %1559 = vmatprep.subr.bf16.mxu0 0
    %1560 = vmatpush1.bf16.msra.mxu0 0
    %1561 = vmatprep.subr.bf16.mxu0 0
    %1562 = vmatpush1.bf16.msra.mxu0 0
    %1563 = vmatprep.subr.bf16.mxu0 0
    %1564 = vmatpush1.bf16.msra.mxu0 %v1547
    %1565 = vmatprep.subr.bf16.mxu0 0
    %1566 = vmatpush2.bf16.msra.mxu0 0
    %1567 = vmatprep.subr.bf16.mxu0 0
    %1568 = vmatpush2.bf16.msra.mxu0 0
    %1569 = vmatprep.subr.bf16.mxu0 0
    %1570 = vmatpush2.bf16.msra.mxu0 0
    %1571 = vmatprep.subr.bf16.mxu0 0
    %1572 = vmatpush2.bf16.msra.mxu0 0
    %1573 = vmatprep.subr.bf16.mxu0 0
    %1574 = vmatpush2.bf16.msra.mxu0 0
    %1575 = vmatprep.subr.bf16.mxu0 0
    %1576 = vmatpush2.bf16.msra.mxu0 0
    %1577 = vmatprep.subr.bf16.mxu0 0
    %1578 = vmatpush2.bf16.msra.mxu0 0
    %1579 = vmatprep.subr.bf16.mxu0 0
    %1580 = vmatpush2.bf16.msra.mxu0 0
    %1581 = vmatprep.mubr.bf16.mxu0 0
    %1582 = vmatmul.mubr.bf16.gmra.mxu0 %v1544
    %v1583 = vpop.f32.mrf.mxu0
    %v1584 = vadd.f32 0.0, %v1583
    %v1585 = vpop.f32.mrf.mxu0
    %v1586 = vpop.f32.mrf.mxu0
    %v1587 = vadd.f32 0.0, %v1586
    %v1588 = vpop.f32.mrf.mxu0
    %1589 = vdwg.mxu0
    %v1590 = vadd.f32 %v1221, %v1584
    %v1591 = vadd.f32 %v1222, %v1587
    %v1592 = vld [vmem:[%s4] sm:$0x1]
    %v1594 = vlaneseq
    %v1595 = vshrl.u32 %v1594, 7
    %v1596 = vsub.s32 0, %v1595
    %v1597 = vrot.slane %v1592, %v1596
    %v1599 = vadd.f32 %v1590, %v1597
    %v1600 = vadd.f32 %v1591, %v1597
    %v1601 = vadd.f32 %v113, %v1599
    %v1602 = vadd.f32 %v114, %v1600
    %v1603 = vsel %vm139, %v1601, 0.0
    %1604 = vadd.xlane.f32.xlu0 %v1603
    %v1605 = vpop.xlane.xlu0 %1604
    %v1606 = vsel %vm139, %v1602, 0.0
    %1607 = vadd.xlane.f32.xlu0 %v1606
    %v1608 = vpop.xlane.xlu0 %1607
    %v1609 = vrcp.pop 32.0
    %v1610 = vmul.f32 %v1605, %v1609
    %v1611 = vmul.f32 %v1608, %v1609
    %v1612 = vsub.f32 %v1601, %v1610
    %v1613 = vsub.f32 %v1602, %v1611
    %v1614 = vmul.f32 %v1612, %v1612
    %v1615 = vmul.f32 %v1613, %v1613
    %v1616 = vsel %vm139, %v1614, 0.0
    %1617 = vadd.xlane.f32.xlu0 %v1616
    %v1618 = vpop.xlane.xlu0 %1617
    %v1619 = vsel %vm139, %v1615, 0.0
    %1620 = vadd.xlane.f32.xlu0 %v1619
    %v1621 = vpop.xlane.xlu0 %1620
    %v1622 = vmul.f32 %v1618, %v1609
    %v1623 = vmul.f32 %v1621, %v1609
    %v1624 = vadd.f32 %v1622, 1e-05
    %v1625 = vadd.f32 %v1623, 1e-05
    %v1626 = vrsqrt.pop %v1624
    %v1627 = vrsqrt.pop %v1625
    %v1628 = vmul.f32 %v1612, %v1626
    %v1629 = vmul.f32 %v1613, %v1627
    %v1630 = vld [vmem:[%s5] sm:$0x1]
    %v1632 = vlaneseq
    %v1633 = vshrl.u32 %v1632, 7
    %v1634 = vsub.s32 0, %v1633
    %v1635 = vrot.slane %v1630, %v1634
    %v1637 = vmul.f32 %v1628, %v1635
    %v1638 = vmul.f32 %v1629, %v1635
    %v1639 = vld [vmem:[%s6] sm:$0x1]
    %v1641 = vlaneseq
    %v1642 = vshrl.u32 %v1641, 7
    %v1643 = vsub.s32 0, %v1642
    %v1644 = vrot.slane %v1639, %v1643
    %v1646 = vadd.f32 %v1637, %v1644
    %v1647 = vadd.f32 %v1638, %v1644
    %v1648 = vpack.c.bf16 %v1647, %v1646
    %v1649 = vld [vmem:[#allocation7] sm:$0xf]
    %v1650 = vld [vmem:[#allocation7 + $0x4] sm:$0xf]
    %v1651 = vld [vmem:[#allocation7 + $0x8] sm:$0xf]
    %v1652 = vld [vmem:[#allocation7 + $0xc] sm:$0xf]
    %v1653 = vld [vmem:[%s8] sm:$0x1]
    %v1655 = vlaneseq
    %v1656 = vshrl.u32 %v1655, 7
    %v1657 = vsub.s32 0, %v1656
    %v1658 = vrot.slane %v1653, %v1657
    %v1664 = vunpack.c.l.b16 %v1649
    %v1665 = vunpack.c.l.b16 %v1650
    %v1666 = vunpack.c.l.b16 %v1651
    %v1667 = vunpack.c.l.b16 %v1652
    %v1668 = vpack.c.b16 %v1665, %v1664
    %v1669 = vpack.c.b16 %v1667, %v1666
    %v1673 = vsel %vm139, %v1648, 0
    %1675 = vmatprep.subr.bf16.mxu0 0
    %1676 = vmatpush1.bf16.msra.mxu0 0
    %1677 = vmatprep.subr.bf16.mxu0 0
    %1678 = vmatpush1.bf16.msra.mxu0 0
    %1679 = vmatprep.subr.bf16.mxu0 0
    %1680 = vmatpush1.bf16.msra.mxu0 0
    %1681 = vmatprep.subr.bf16.mxu0 0
    %1682 = vmatpush1.bf16.msra.mxu0 0
    %1683 = vmatprep.subr.bf16.mxu0 0
    %1684 = vmatpush1.bf16.msra.mxu0 0
    %1685 = vmatprep.subr.bf16.mxu0 0
    %1686 = vmatpush1.bf16.msra.mxu0 0
    %1687 = vmatprep.subr.bf16.mxu0 0
    %1688 = vmatpush1.bf16.msra.mxu0 %v1669
    %1689 = vmatprep.subr.bf16.mxu0 0
    %1690 = vmatpush1.bf16.msra.mxu0 %v1668
    %1691 = vmatprep.subr.bf16.mxu0 0
    %1692 = vmatpush2.bf16.msra.mxu0 0
    %1693 = vmatprep.subr.bf16.mxu0 0
    %1694 = vmatpush2.bf16.msra.mxu0 0
    %1695 = vmatprep.subr.bf16.mxu0 0
    %1696 = vmatpush2.bf16.msra.mxu0 0
    %1697 = vmatprep.subr.bf16.mxu0 0
    %1698 = vmatpush2.bf16.msra.mxu0 0
    %1699 = vmatprep.subr.bf16.mxu0 0
    %1700 = vmatpush2.bf16.msra.mxu0 0
    %1701 = vmatprep.subr.bf16.mxu0 0
    %1702 = vmatpush2.bf16.msra.mxu0 0
    %1703 = vmatprep.subr.bf16.mxu0 0
    %1704 = vmatpush2.bf16.msra.mxu0 0
    %1705 = vmatprep.subr.bf16.mxu0 0
    %1706 = vmatpush2.bf16.msra.mxu0 0
    %1707 = vmatprep.mubr.bf16.mxu0 0
    %1708 = vmatmul.mubr.bf16.gmra.mxu0 %v1673
    %v1709 = vpop.f32.mrf.mxu0
    %v1710 = vadd.f32 %v1658, %v1709
    %v1711 = vpop.f32.mrf.mxu0
    %v1712 = vpop.f32.mrf.mxu0
    %v1713 = vadd.f32 %v1658, %v1712
    %v1714 = vpop.f32.mrf.mxu0
    %1715 = vdwg.mxu0
    %v1716 = vmax.f32 %v1710, 0.0
    %v1717 = vmax.f32 %v1713, 0.0
    %v1718 = vpack.c.bf16 %v1717, %v1716
    %v1719 = vld [vmem:[#allocation9] sm:$0xf]
    %v1720 = vld [vmem:[#allocation9 + $0x4] sm:$0xf]
    %v1721 = vld [vmem:[#allocation9 + $0x8] sm:$0xf]
    %v1722 = vld [vmem:[#allocation9 + $0xc] sm:$0xf]
    %v1723 = vld [vmem:[#allocation9 + $0x10] sm:$0xf]
    %v1724 = vld [vmem:[#allocation9 + $0x14] sm:$0xf]
    %v1725 = vld [vmem:[#allocation9 + $0x18] sm:$0xf]
    %v1726 = vld [vmem:[#allocation9 + $0x1c] sm:$0xf]
    %v1727 = vld [vmem:[%s10] sm:$0x1]
    %v1729 = vlaneseq
    %v1730 = vshrl.u32 %v1729, 7
    %v1731 = vsub.s32 0, %v1730
    %v1732 = vrot.slane %v1727, %v1731
    %v1742 = vunpack.c.l.b16 %v1719
    %v1743 = vunpack.c.l.b16 %v1720
    %v1744 = vunpack.c.l.b16 %v1721
    %v1745 = vunpack.c.l.b16 %v1722
    %v1746 = vunpack.c.l.b16 %v1723
    %v1747 = vunpack.c.l.b16 %v1724
    %v1748 = vunpack.c.l.b16 %v1725
    %v1749 = vunpack.c.l.b16 %v1726
    %v1750 = vpack.c.b16 %v1743, %v1742
    %v1751 = vpack.c.b16 %v1745, %v1744
    %v1752 = vpack.c.b16 %v1747, %v1746
    %v1753 = vpack.c.b16 %v1749, %v1748
    %vm1758 = vcmask 523264
    %v1760 = vsel %vm1758, %v1718, 0
    %1762 = vmatprep.subr.bf16.mxu0 0
    %1763 = vmatpush1.bf16.msra.mxu0 0
    %1764 = vmatprep.subr.bf16.mxu0 0
    %1765 = vmatpush1.bf16.msra.mxu0 0
    %1766 = vmatprep.subr.bf16.mxu0 0
    %1767 = vmatpush1.bf16.msra.mxu0 0
    %1768 = vmatprep.subr.bf16.mxu0 0
    %1769 = vmatpush1.bf16.msra.mxu0 0
    %1770 = vmatprep.subr.bf16.mxu0 0
    %1771 = vmatpush1.bf16.msra.mxu0 %v1753
    %1772 = vmatprep.subr.bf16.mxu0 0
    %1773 = vmatpush1.bf16.msra.mxu0 %v1752
    %1774 = vmatprep.subr.bf16.mxu0 0
    %1775 = vmatpush1.bf16.msra.mxu0 %v1751
    %1776 = vmatprep.subr.bf16.mxu0 0
    %1777 = vmatpush1.bf16.msra.mxu0 %v1750
    %1778 = vmatprep.subr.bf16.mxu0 0
    %1779 = vmatpush2.bf16.msra.mxu0 0
    %1780 = vmatprep.subr.bf16.mxu0 0
    %1781 = vmatpush2.bf16.msra.mxu0 0
    %1782 = vmatprep.subr.bf16.mxu0 0
    %1783 = vmatpush2.bf16.msra.mxu0 0
    %1784 = vmatprep.subr.bf16.mxu0 0
    %1785 = vmatpush2.bf16.msra.mxu0 0
    %1786 = vmatprep.subr.bf16.mxu0 0
    %1787 = vmatpush2.bf16.msra.mxu0 0
    %1788 = vmatprep.subr.bf16.mxu0 0
    %1789 = vmatpush2.bf16.msra.mxu0 0
    %1790 = vmatprep.subr.bf16.mxu0 0
    %1791 = vmatpush2.bf16.msra.mxu0 0
    %1792 = vmatprep.subr.bf16.mxu0 0
    %1793 = vmatpush2.bf16.msra.mxu0 0
    %1794 = vmatprep.mubr.bf16.mxu0 0
    %1795 = vmatmul.mubr.bf16.gmra.mxu0 %v1760
    %v1796 = vpop.f32.mrf.mxu0
    %v1797 = vadd.f32 %v1732, %v1796
    %v1798 = vpop.f32.mrf.mxu0
    %v1799 = vpop.f32.mrf.mxu0
    %v1800 = vadd.f32 %v1732, %v1799
    %v1801 = vpop.f32.mrf.mxu0
    %1802 = vdwg.mxu0
    %v1803 = vadd.f32 %v1646, %v1797
    %v1804 = vadd.f32 %v1647, %v1800
    %v1805 = vsel %vm139, %v1803, 0.0
    %1806 = vadd.xlane.f32.xlu0 %v1805
    %v1807 = vpop.xlane.xlu0 %1806
    %v1808 = vsel %vm139, %v1804, 0.0
    %1809 = vadd.xlane.f32.xlu0 %v1808
    %v1810 = vpop.xlane.xlu0 %1809
    %v1811 = vmul.f32 %v1807, %v1609
    %v1812 = vmul.f32 %v1810, %v1609
    %v1813 = vsub.f32 %v1803, %v1811
    %v1814 = vsub.f32 %v1804, %v1812
    %v1815 = vmul.f32 %v1813, %v1813
    %v1816 = vmul.f32 %v1814, %v1814
    %v1817 = vsel %vm139, %v1815, 0.0
    %1818 = vadd.xlane.f32.xlu0 %v1817
    %v1819 = vpop.xlane.xlu0 %1818
    %v1820 = vsel %vm139, %v1816, 0.0
    %1821 = vadd.xlane.f32.xlu0 %v1820
    %v1822 = vpop.xlane.xlu0 %1821
    %v1823 = vmul.f32 %v1819, %v1609
    %v1824 = vmul.f32 %v1822, %v1609
    %v1825 = vadd.f32 %v1823, 1e-05
    %v1826 = vadd.f32 %v1824, 1e-05
    %v1827 = vrsqrt.pop %v1825
    %v1828 = vrsqrt.pop %v1826
    %v1829 = vmul.f32 %v1813, %v1827
    %v1830 = vmul.f32 %v1814, %v1828
    %v1831 = vld [vmem:[%s11] sm:$0x1]
    %v1833 = vlaneseq
    %v1834 = vshrl.u32 %v1833, 7
    %v1835 = vsub.s32 0, %v1834
    %v1836 = vrot.slane %v1831, %v1835
    %v1838 = vmul.f32 %v1829, %v1836
    %v1839 = vmul.f32 %v1830, %v1836
    %v1840 = vld [vmem:[%s12] sm:$0x1]
    %v1842 = vlaneseq
    %v1843 = vshrl.u32 %v1842, 7
    %v1844 = vsub.s32 0, %v1843
    %v1845 = vrot.slane %v1840, %v1844
    %v1847 = vadd.f32 %v1838, %v1845
    %v1848 = vadd.f32 %v1839, %v1845
    %1849 = vst.msk [vmem:[%s13] sm:$0xff] %vm139, %v1847
    %1850 = vst.msk [vmem:[%s13 + $0x8] sm:$0xff] %vm139, %v1848
    // Predicated region
    $region74: #{branch_1_fun.1} parent=1 // pred_check
      _
    $region75: #{branch_1_fun.1} parent=1 // pred_check_branch
      %1852 = sbr.rel (0) target = $region77
    $region76: #{branch_1_fun.1} parent=1 // pred_region
      _
    $region77: #{branch_1_fun.1} parent=1 // pred_fallthru
      _
    // Predicated region
    $region78: #{branch_1_fun.1} parent=1 // pred_check
      _
    $region79: #{branch_1_fun.1} parent=1 // pred_check_branch
      %1854 = sbr.rel (0) target = $region81
    $region80: #{branch_1_fun.1} parent=1 // pred_region
      _
    $region81: #{branch_1_fun.1} parent=1 // pred_fallthru
      _
    %1855 = vsyncpa [#allocation3], 1
    %1856 = vsyncpa [#allocation5], 1
    %1857 = vsyncpa [#allocation8], 1

</llo_original>
